<compile_context>
chip_gen: v6e
topology: v6e:2x2x1
jax: 0.10.0
libtpu: 0.0.40
codegen_flags: <defaults>
</compile_context>

<pallas_src>
import functools

import jax
import jax.numpy as jnp
from jax.experimental import pallas as pl
from jax.experimental.pallas import tpu as pltpu

_BN_EPS = 1e-5


def _round_up(x, m):
    return ((x + m - 1) // m) * m


def _pick_tm(m):
    """Prefer >=2 row blocks (megacore), else largest divisor, else full M."""
    for tm in (512, 256, 128, 64, 32, 16, 8):
        if m % tm == 0 and m // tm >= 2:
            return tm
    for tm in (512, 256, 128, 64, 32, 16, 8):
        if m % tm == 0:
            return tm
    return m


def _pick_tn(np_):
    """Lane-dense N tiles; >=2 n-blocks when the layer is wide enough."""
    if np_ % 256 == 0 and np_ >= 512:
        return 256
    if np_ % 128 == 0:
        return 128
    return np_


def _pick_tk(kp, tn):
    """Largest 128-multiple K tile dividing Kp with tk*tn*2B <= ~2 MB."""
    limit = max(128, (2 * 1024 * 1024) // (tn * 2))
    if kp <= limit:
        return kp
    best = 128
    t = 128
    while t <= limit:
        if kp % t == 0:
            best = t
        t += 128
    return best


# ----------------------------------------------------------------------------
# Pallas kernels
# ----------------------------------------------------------------------------
def _gemm_bias_act_kernel(a_ref, w_ref, b_ref, o_ref, acc_ref, *, apply_relu):
    """o = act(A @ W_scaled + bias); f32 accumulate in scratch, bf16 store."""
    k = pl.program_id(2)

    @pl.when(k == 0)
    def _init():
        acc_ref[...] = jnp.zeros_like(acc_ref)

    acc_ref[...] += jnp.dot(a_ref[...], w_ref[...],
                            preferred_element_type=jnp.float32)

    @pl.when(k == pl.num_programs(2) - 1)
    def _finalize():
        y = acc_ref[...] + b_ref[...]
        if apply_relu:
            y = jnp.maximum(y, 0.0)
        o_ref[...] = y.astype(o_ref.dtype)


def _gemm_bias_res_act_kernel(a_ref, w_ref, b_ref, r_ref, o_ref, acc_ref,
                              *, apply_relu):
    """o = act(A @ W_scaled + bias + residual)."""
    k = pl.program_id(2)

    @pl.when(k == 0)
    def _init():
        acc_ref[...] = jnp.zeros_like(acc_ref)

    acc_ref[...] += jnp.dot(a_ref[...], w_ref[...],
                            preferred_element_type=jnp.float32)

    @pl.when(k == pl.num_programs(2) - 1)
    def _finalize():
        y = acc_ref[...] + b_ref[...] + r_ref[...].astype(jnp.float32)
        if apply_relu:
            y = jnp.maximum(y, 0.0)
        o_ref[...] = y.astype(o_ref.dtype)


def _maxpool_kernel(p_ref, o_ref):
    """Running max over the tap grid axis into the resident output block."""
    t = pl.program_id(2)

    @pl.when(t == 0)
    def _init():
        o_ref[...] = p_ref[0]

    @pl.when(t > 0)
    def _update():
        o_ref[...] = jnp.maximum(o_ref[...], p_ref[0])


# ----------------------------------------------------------------------------
# Pallas wrappers
# ----------------------------------------------------------------------------
def fused_matmul(a, gw, residual=None, apply_relu=False):
    """A (M, Kp) bf16 @ prepared weight -> (M, Np) bf16, fused bias/res/relu."""
    M, Kp = a.shape
    assert Kp == gw['kp'], (Kp, gw['kp'])
    Np = gw['np']
    tk, tn = gw['tk'], gw['tn']
    tm = _pick_tm(M)
    Mp = _round_up(M, tm)
    if Mp != M:
        a = jnp.pad(a, ((0, Mp - M), (0, 0)))
        if residual is not None:
            residual = jnp.pad(residual, ((0, Mp - M), (0, 0)))

    in_specs = [
        pl.BlockSpec((tm, tk), lambda m, n, k: (m, k)),   # A (bf16)
        pl.BlockSpec((tk, tn), lambda m, n, k: (k, n)),   # W (bf16, scale folded)
        pl.BlockSpec((1, tn), lambda m, n, k: (0, n)),    # bias (f32)
    ]
    operands = [a, gw['w'], gw['bias']]

    if residual is None:
        kernel = functools.partial(_gemm_bias_act_kernel, apply_relu=apply_relu)
    else:
        in_specs.append(pl.BlockSpec((tm, tn), lambda m, n, k: (m, n)))
        operands.append(residual)                          # bf16 residual
        kernel = functools.partial(_gemm_bias_res_act_kernel,
                                   apply_relu=apply_relu)

    out = pl.pallas_call(
        kernel,
        out_shape=jax.ShapeDtypeStruct((Mp, Np), jnp.bfloat16),
        grid_spec=pltpu.PrefetchScalarGridSpec(
            num_scalar_prefetch=0,
            grid=(Mp // tm, Np // tn, Kp // tk),
            in_specs=in_specs,
            out_specs=pl.BlockSpec((tm, tn), lambda m, n, k: (m, n)),
            scratch_shapes=[pltpu.VMEM((tm, tn), jnp.float32)],
        ),
        compiler_params=pltpu.CompilerParams(
            dimension_semantics=("parallel", "parallel", "arbitrary"),
            vmem_limit_bytes=32 * 1024 * 1024),
    )(*operands)
    if Mp != M:
        out = out[:M]
    return out


def _extract_patches_ndhwc(x, k, stride, pad):
    """x: (B,D,H,W,C) -> im2col (B*Do*Ho*Wo, k^3*C), column order (kd,kh,kw,c)."""
    B, D, H, W, C = x.shape
    Do = (D + 2 * pad - k) // stride + 1
    Ho = (H + 2 * pad - k) // stride + 1
    Wo = (W + 2 * pad - k) // stride + 1
    xp = jnp.pad(x, ((0, 0), (pad, pad), (pad, pad), (pad, pad), (0, 0)))
    cols = []
    for kd in range(k):
        for kh in range(k):
            for kw in range(k):
                cols.append(xp[:,
                               kd:kd + stride * Do:stride,
                               kh:kh + stride * Ho:stride,
                               kw:kw + stride * Wo:stride, :])
    p = jnp.concatenate(cols, axis=-1)        # (B, Do, Ho, Wo, k^3*C)
    return p.reshape(B * Do * Ho * Wo, k * k * k * C), (Do, Ho, Wo)


def conv3d_bn_act(x, gw, stride, pad, relu, residual=None):
    """Conv3d + (inference) BN3d [+ residual] [+ ReLU]; channels-last bf16."""
    B = x.shape[0]
    k = gw['k']
    patches, (Do, Ho, Wo) = _extract_patches_ndhwc(x, k, stride, pad)
    K = patches.shape[1]
    if K < gw['kp']:                          # only conv1 (K=343 -> 384)
        patches = jnp.pad(patches, ((0, 0), (0, gw['kp'] - K)))
    res = None
    if residual is not None:
        res = residual.reshape(-1, gw['np'])  # already bf16, channel-padded
    y = fused_matmul(patches, gw, residual=res, apply_relu=relu)
    return y.reshape(B, Do, Ho, Wo, gw['np'])


def maxpool3d(x, k=3, stride=2, pad=1):
    """MaxPool3d: tap axis as grid reduction, running max into resident out."""
    B, D, H, W, C = x.shape
    Do = (D + 2 * pad - k) // stride + 1
    Ho = (H + 2 * pad - k) // stride + 1
    Wo = (W + 2 * pad - k) // stride + 1
    xp = jnp.pad(x, ((0, 0), (pad, pad), (pad, pad), (pad, pad), (0, 0)),
                 constant_values=-jnp.inf)
    taps = []
    for kd in range(k):
        for kh in range(k):
            for kw in range(k):
                taps.append(xp[:,
                               kd:kd + stride * Do:stride,
                               kh:kh + stride * Ho:stride,
                               kw:kw + stride * Wo:stride, :])
    R = B * Do * Ho * Wo
    p = jnp.stack(taps, axis=0).reshape(k ** 3, R, C)     # (k^3, R, C) bf16

    tm = _pick_tm(R)
    tn = 128 if C % 128 == 0 else C
    Rp = _round_up(R, tm)
    Cp = _round_up(C, tn)
    if (Rp, Cp) != (R, C):
        p = jnp.pad(p, ((0, 0), (0, Rp - R), (0, Cp - C)),
                    constant_values=-jnp.inf)

    out = pl.pallas_call(
        _maxpool_kernel,
        out_shape=jax.ShapeDtypeStruct((Rp, Cp), x.dtype),
        grid_spec=pltpu.PrefetchScalarGridSpec(
            num_scalar_prefetch=0,
            grid=(Rp // tm, Cp // tn, k ** 3),
            in_specs=[pl.BlockSpec((1, tm, tn), lambda r, c, t: (t, r, c))],
            out_specs=pl.BlockSpec((tm, tn), lambda r, c, t: (r, c)),
        ),
        compiler_params=pltpu.CompilerParams(
            dimension_semantics=("parallel", "parallel", "arbitrary")),
    )(p)
    if (Rp, Cp) != (R, C):
        out = out[:R, :C]
    return out.reshape(B, Do, Ho, Wo, C)


# ----------------------------------------------------------------------------
# Parameter construction (deterministic, PyTorch shapes) + one-time prep
# ----------------------------------------------------------------------------
def conv_init(key, cout, cin, k):
    k1, k2 = jax.random.split(key)
    fan_in = cin * k ** 3
    w = jax.random.normal(k1, (cout, cin, k, k, k), jnp.float32) * (2.0 / fan_in) ** 0.5
    b = jax.random.normal(k2, (cout,), jnp.float32) * 0.01
    return w, b


def bn_init(c):
    return dict(gamma=jnp.ones((c,), jnp.float32),
                beta=jnp.zeros((c,), jnp.float32),
                mean=jnp.zeros((c,), jnp.float32),
                var=jnp.ones((c,), jnp.float32))


def make_block(key, cin, cout, stride):
    k1, k2, k3 = jax.random.split(key, 3)
    p = {'stride': stride, 'downsample': (stride != 1) or (cin != cout)}
    p['w1'], p['b1'] = conv_init(k1, cout, cin, 3)
    p['bn1'] = bn_init(cout)
    p['w2'], p['b2'] = conv_init(k2, cout, cout, 3)
    p['bn2'] = bn_init(cout)
    if p['downsample']:
        p['ws'], p['bs'] = conv_init(k3, cout, cin, 1)
        p['bns'] = bn_init(cout)
    return p


def build_params(key, in_channels=1, latent_dim=32):
    keys = jax.random.split(key, 7)
    params = {}
    params['conv1_w'], params['conv1_b'] = conv_init(keys[0], 64, in_channels, 7)
    params['bn1'] = bn_init(64)
    layer_cfg = [(64, 64, 3, 1), (64, 128, 4, 2), (128, 256, 6, 2), (256, 512, 3, 2)]
    for li, (cin, cout, blocks, stride) in enumerate(layer_cfg):
        bkeys = jax.random.split(keys[1 + li], blocks)
        blks = [make_block(bkeys[0], cin, cout, stride)]
        for bi in range(1, blocks):
            blks.append(make_block(bkeys[bi], cout, cout, 1))
        params[f'layer{li + 1}'] = blks
    kf1, kf2 = jax.random.split(keys[5])
    params['fc_mean_w'] = jax.random.normal(kf1, (latent_dim, 512), jnp.float32) * (1.0 / 512) ** 0.5
    params['fc_mean_b'] = jax.random.normal(keys[6], (latent_dim,), jnp.float32) * 0.01
    params['fc_logvar_w'] = jax.random.normal(kf2, (latent_dim, 512), jnp.float32) * (1.0 / 512) ** 0.5
    params['fc_logvar_b'] = jnp.zeros((latent_dim,), jnp.float32)
    return params


def prep_conv(w, b, bn, cin_pad):
    """Fold BN scale into weights, pad per-tap Cin to producer's padded width,
    reshape to GEMM (Kp, Np) bf16, fold bias; pick per-layer tiles."""
    O, Cin, k, _, _ = w.shape
    scale = bn['gamma'] / jnp.sqrt(bn['var'] + _BN_EPS)          # (O,)
    bias = bn['beta'] + (b - bn['mean']) * scale                 # (O,)
    wt = w.transpose(2, 3, 4, 1, 0) * scale                      # (k,k,k,Cin,O)
    if cin_pad > Cin:
        wt = jnp.pad(wt, ((0, 0), (0, 0), (0, 0), (0, cin_pad - Cin), (0, 0)))
    K = k ** 3 * cin_pad
    wm = wt.reshape(K, O)
    Kp = _round_up(K, 128)
    Np = _round_up(O, 128)
    tn = _pick_tn(Np)
    tk = _pick_tk(Kp, tn)
    return dict(
        w=jnp.pad(wm, ((0, Kp - K), (0, Np - O))).astype(jnp.bfloat16),
        bias=jnp.pad(bias, (0, Np - O)).reshape(1, Np),          # f32
        k=k, n=O, np=Np, kp=Kp, tk=tk, tn=tn)


def prepare_params(params, in_channels=1):
    cur = in_channels   # channel width (incl. lane padding) of current activation
    prepared = {'conv1': prep_conv(params['conv1_w'], params['conv1_b'],
                                   params['bn1'], cin_pad=cur)}
    cur = prepared['conv1']['np']
    for name in ('layer1', 'layer2', 'layer3', 'layer4'):
        blks = []
        for p in params[name]:
            q = {'stride': p['stride'], 'downsample': p['downsample']}
            q['g1'] = prep_conv(p['w1'], p['b1'], p['bn1'], cin_pad=cur)
            mid = q['g1']['np']
            q['g2'] = prep_conv(p['w2'], p['b2'], p['bn2'], cin_pad=mid)
            if p['downsample']:
                q['gs'] = prep_conv(p['ws'], p['bs'], p['bns'], cin_pad=cur)
            blks.append(q)
            cur = q['g2']['np']
        prepared[name] = blks
    # Tiny final GEMM: fuse fc_mean/fc_logvar, keep in plain XLA (per review).
    prepared['fc_w'] = jnp.concatenate([params['fc_mean_w'].T,
                                        params['fc_logvar_w'].T], axis=1)
    prepared['fc_b'] = jnp.concatenate([params['fc_mean_b'],
                                        params['fc_logvar_b']])
    return prepared


# ----------------------------------------------------------------------------
# Forward pass
# ----------------------------------------------------------------------------
def resblock_forward(x, p):
    if p['downsample']:
        identity = conv3d_bn_act(x, p['gs'], stride=p['stride'], pad=0,
                                 relu=False)
    else:
        identity = x
    out = conv3d_bn_act(x, p['g1'], stride=p['stride'], pad=1, relu=True)
    out = conv3d_bn_act(out, p['g2'], stride=1, pad=1, relu=True,
                        residual=identity)
    return out


def resnet_encoder_forward(prepared, x, latent_dim=32):
    # x is NCDHW (PyTorch convention); go channels-last bf16 once, stay there.
    x = x.transpose(0, 2, 3, 4, 1).astype(jnp.bfloat16)      # (B, D, H, W, C)
    x = conv3d_bn_act(x, prepared['conv1'], stride=2, pad=3, relu=True)
    x = maxpool3d(x, k=3, stride=2, pad=1)
    for name in ('layer1', 'layer2', 'layer3', 'layer4'):
        for blk in prepared[name]:
            x = resblock_forward(x, blk)
    # AdaptiveAvgPool3d((1,1,1)) + flatten (trivial reduction; XLA glue)
    feat = jnp.mean(x.astype(jnp.float32), axis=(1, 2, 3))   # (B, 512)
    feat = feat[:, :prepared['fc_w'].shape[0]]
    z = feat @ prepared['fc_w'] + prepared['fc_b']           # (B, 2*latent)
    return z[:, :latent_dim], z[:, latent_dim:2 * latent_dim]


# ----------------------------------------------------------------------------
if __name__ == "__main__":
    key = jax.random.PRNGKey(0)
    kx, kp = jax.random.split(key)

    B, C, D, H, W = 2, 1, 16, 16, 16
    LATENT = 32
    x = jax.random.normal(kx, (B, C, D, H, W), jnp.float32)

    params = build_params(kp, in_channels=C, latent_dim=LATENT)
    prepared = prepare_params(params, in_channels=C)

    z_mean, z_logvar = resnet_encoder_forward(prepared, x, latent_dim=LATENT)
    z_mean = jax.block_until_ready(z_mean)
    z_logvar = jax.block_until_ready(z_logvar)

    assert z_mean.shape == (B, LATENT), z_mean.shape
    assert z_logvar.shape == (B, LATENT), z_logvar.shape
    assert bool(jnp.all(jnp.isfinite(z_mean))) and bool(jnp.all(jnp.isfinite(z_logvar)))

    print("KERNEL_OK")
</pallas_src>

<mosaic_0001>
module attributes {stable_mosaic.version = 11 : i64} {
  func.func @_gemm_bias_act_kernel(%arg0: i32, %arg1: i32, %arg2: i32, %arg3: memref<512x384xbf16, #tpu.memory_space<vmem>>, %arg4: memref<384x128xbf16, #tpu.memory_space<vmem>>, %arg5: memref<1x128xf32, #tpu.memory_space<vmem>>, %arg6: memref<512x128xbf16, #tpu.memory_space<vmem>>, %arg7: memref<512x128xf32, #tpu.memory_space<vmem>>) attributes {dimension_semantics = [#tpu.dimension_semantics<parallel>, #tpu.dimension_semantics<parallel>, #tpu.dimension_semantics<arbitrary>], iteration_bounds = array<i64: 2, 1, 1>, scalar_prefetch = 0 : i64, scratch_operands = 1 : i64, tpu.core_type = #tpu.core_type<tc>, window_params = [{transform_indices = @transform_0, window_bounds = array<i64: 512, 384>}, {transform_indices = @transform_1, window_bounds = array<i64: 384, 128>}, {transform_indices = @transform_2, window_bounds = array<i64: 1, 128>}, {transform_indices = @transform_3, window_bounds = array<i64: 512, 128>}]} {
    %c0_i32 = arith.constant 0 : i32
    %0 = arith.cmpi eq, %arg2, %c0_i32 : i32
    %1 = arith.extui %0 : i1 to i32
    %c0_i32_0 = arith.constant 0 : i32
    %2 = arith.cmpi ne, %1, %c0_i32_0 : i32
    scf.if %2 {
      %cst_10 = arith.constant 0.000000e+00 : f32
      %12 = vector.broadcast %cst_10 : f32 to vector<512x128xf32>
      %c0_11 = arith.constant 0 : index
      %c0_12 = arith.constant 0 : index
      %13 = vector.load %arg7[%c0_11, %c0_12] : memref<512x128xf32, #tpu.memory_space<vmem>>, vector<512x128xf32>
      tpu.vector_store %arg7[%c0_11, %c0_12], %12 {strides = array<i32>} : memref<512x128xf32, #tpu.memory_space<vmem>>, vector<512x128xf32>,
    } else {
    }
    %c0 = arith.constant 0 : index
    %c0_1 = arith.constant 0 : index
    %3 = vector.load %arg7[%c0, %c0_1] : memref<512x128xf32, #tpu.memory_space<vmem>>, vector<512x128xf32>
    %c0_2 = arith.constant 0 : index
    %c0_3 = arith.constant 0 : index
    %4 = vector.load %arg3[%c0_2, %c0_3] : memref<512x384xbf16, #tpu.memory_space<vmem>>, vector<512x384xbf16>
    %c0_4 = arith.constant 0 : index
    %c0_5 = arith.constant 0 : index
    %5 = vector.load %arg4[%c0_4, %c0_5] : memref<384x128xbf16, #tpu.memory_space<vmem>>, vector<384x128xbf16>
    %cst = arith.constant dense<0.000000e+00> : vector<512x128xf32>
    %6 = tpu.matmul %4, %5, %cst {dimension_numbers = #tpu.dot_dimension_numbers<[1], [0], [0], [1], [0, 0, 1, 1], [], []>} : vector<512x384xbf16>, vector<384x128xbf16>, vector<512x128xf32> -> vector<512x128xf32>
    %7 = arith.addf %3, %6 : vector<512x128xf32>
    %c0_6 = arith.constant 0 : index
    %c0_7 = arith.constant 0 : index
    %8 = vector.load %arg7[%c0_6, %c0_7] : memref<512x128xf32, #tpu.memory_space<vmem>>, vector<512x128xf32>
    tpu.vector_store %arg7[%c0_6, %c0_7], %7 {strides = array<i32>} : memref<512x128xf32, #tpu.memory_space<vmem>>, vector<512x128xf32>,
    %c0_i32_8 = arith.constant 0 : i32
    %9 = arith.cmpi eq, %arg2, %c0_i32_8 : i32
    %10 = arith.extui %9 : i1 to i32
    %c0_i32_9 = arith.constant 0 : i32
    %11 = arith.cmpi ne, %10, %c0_i32_9 : i32
    scf.if %11 {
      %c0_10 = arith.constant 0 : index
      %c0_11 = arith.constant 0 : index
      %12 = vector.load %arg7[%c0_10, %c0_11] : memref<512x128xf32, #tpu.memory_space<vmem>>, vector<512x128xf32>
      %c0_12 = arith.constant 0 : index
      %c0_13 = arith.constant 0 : index
      %13 = vector.load %arg5[%c0_12, %c0_13] : memref<1x128xf32, #tpu.memory_space<vmem>>, vector<1x128xf32>
      %14 = vector.broadcast %13 : vector<1x128xf32> to vector<512x128xf32>
      %15 = arith.addf %12, %14 : vector<512x128xf32>
      %cst_14 = arith.constant 0.000000e+00 : f32
      %16 = vector.broadcast %cst_14 : f32 to vector<512x128xf32>
      %17 = arith.maximumf %15, %16 : vector<512x128xf32>
      %18 = arith.truncf %17 : vector<512x128xf32> to vector<512x128xbf16>
      %c0_15 = arith.constant 0 : index
      %c0_16 = arith.constant 0 : index
      %19 = vector.load %arg6[%c0_15, %c0_16] : memref<512x128xbf16, #tpu.memory_space<vmem>>, vector<512x128xbf16>
      tpu.vector_store %arg6[%c0_15, %c0_16], %18 {strides = array<i32>} : memref<512x128xbf16, #tpu.memory_space<vmem>>, vector<512x128xbf16>,
    } else {
    }
    return
  }
  func.func @transform_0(%arg0: i32, %arg1: i32, %arg2: i32) -> (i32, i32) {
    %c0_i32 = arith.constant 0 : i32
    return %arg0, %arg2 : i32, i32
  }
  func.func @transform_1(%arg0: i32, %arg1: i32, %arg2: i32) -> (i32, i32) {
    %c0_i32 = arith.constant 0 : i32
    return %arg2, %arg1 : i32, i32
  }
  func.func @transform_2(%arg0: i32, %arg1: i32, %arg2: i32) -> (i32, i32) {
    %c0_i32 = arith.constant 0 : i32
    %c0_i32_0 = arith.constant 0 : i32
    return %c0_i32, %arg1 : i32, i32
  }
  func.func @transform_3(%arg0: i32, %arg1: i32, %arg2: i32) -> (i32, i32) {
    %c0_i32 = arith.constant 0 : i32
    return %arg0, %arg1 : i32, i32
  }
}

</mosaic_0001>

<llo_original>
// kernel: tpu_custom_call.1
$region0: #{tpu_custom_call.1}
  #allocation0 [shape = 'u32[]', space=smem, size = 0x4, offset = 0x4, fixed_abs, tag = 'smem constant byte address 0x4 - core index']
  #allocation1 [shape = 'u32[144,128]{1,0:T(1,128)}', space=vmem, size = 0x12000, scoped, tag = 'internal scratch']
  #allocation2 [shape = 'f32[512,128]{1,0:T(8,128)}', space=vmem, size = 0x40000, scoped, tag = 'scratch operand']
  %s0 = inlined_call_operand.hbm [shape: bf16[1024,384], index: 0, kind: input, shape index: {}]
  %s1 = inlined_call_operand.hbm [shape: bf16[384,128], index: 1, kind: input, shape index: {}]
  %s2 = inlined_call_operand.vmem [shape: f32[1,128], index: 2, kind: input, shape index: {}]
  %s3 = inlined_call_operand.hbm [shape: bf16[1024,128], index: 3, kind: output, shape index: {}]
  %s4 = sld [smem:[#allocation0]]
  $region61: #{tpu_custom_call.1} parent=0
    _
  %s6 = ssub.s32 1, %s4
  %s7 = scalar_select 0, %s6, %s4
  $region1: #{tpu_custom_call.1} parent=0
    #allocation3 [shape = 'u8[786432]{0}', space=vmem, size = 0xc0000, scoped, tag = 'input window, operand 0']
    #allocation4 [shape = 's32[2]{0}', space=sflag, size = 0x8, scoped, tag = 'scoped memory for tpu_custom_call.1']
    #allocation5 [shape = 's32[2]{0}', space=sflag, size = 0x8, scoped, tag = 'scoped memory for tpu_custom_call.1']
    #allocation6 [shape = 'u8[98304]{0}', space=vmem, size = 0x18000, scoped, tag = 'input window, operand 1, single buffered']
    #allocation7 [shape = 's32[1]{0}', space=sflag, size = 0x4, scoped, tag = 'scoped memory for tpu_custom_call.1']
    #allocation8 [shape = 'u8[262144]{0}', space=vmem, size = 0x40000, scoped, tag = 'output window, operand 0']
    %8 = vsyncpa [#allocation4], 0
    %s9 = scalar_lea.sflag [#allocation4], 1
    %10 = vsyncpa %s9, 0
    %11 = vsyncpa [#allocation7], 0
    %12 = vsyncpa [#allocation5], 0
    %s13 = scalar_lea.sflag [#allocation5], 1
    %14 = vsyncpa %s13, 0
    loop: start=0, step=1, limit=4
    $region2: #{tpu_custom_call.1} parent=1 // loop_pre_header
      _
    $region3: #{tpu_custom_call.1} parent=1 // loop_header
      %s16 = sphi 0, %s20
      %p17 = scmp.ge.s32.totalorder %s16, 4
      %s23 = sphi 0, %s42
      %s24 = sphi 0, %s38
      %s25 = sphi 0, %s34
      %s26 = sphi 0, %s23
      %s27 = sphi 0, %s24
      %s28 = sphi 0, %s25
      %s29 = sphi 0, %s26
      %s30 = sphi 0, %s27
      %s31 = sphi 0, %s28
      %s47 = sphi 0, %s49
      %s50 = sphi 0, %s47
      %s51 = sphi 0, %s50
      %s67 = sphi 0, %s51
      %s75 = sphi 0, %s77
      %s78 = sphi 0, %s75
      %s79 = sphi 0, %s78
      %s95 = sphi 0, %s79
      %s101 = sphi 0, %s103
      %s104 = sphi 0, %s101
      %s105 = sphi 0, %s104
      %s121 = sphi 0, %s105
      %s129 = sphi 0, %s131
      %s132 = sphi 0, %s129
      %s133 = sphi 0, %s132
      %s149 = sphi 0, %s133
    $region4: #{tpu_custom_call.1} parent=1 // loop_header_branch
      %19 = sbr.rel (%p17) target = $region8
    $region5: #{tpu_custom_call.1} parent=1 // loop_body
      %s21 = ssub.s32 %s16, 1
      %s22 = ssub.s32 %s16, 2
      %s32 = sadd.s32 1, %s25
      %p33 = scmp.ge.s32.totalorder %s32, 1
      %s34 = scalar_select %p33, 0, %s32
      %s35 = sadd.s32 1, %s24
      %s36 = scalar_select %p33, %s35, %s24
      %p37 = scmp.ge.s32.totalorder %s36, 1
      %s38 = scalar_select %p37, 0, %s36
      %s39 = sadd.s32 1, %s23
      %s40 = scalar_select %p37, %s39, %s23
      %p41 = scmp.ge.s32.totalorder %s40, 2
      %s42 = scalar_select %p41, 0, %s40
      %s43 = ssub.s32 %s23, %s42
      %s44 = ssub.s32 %s25, %s34
      %s45 = sor.u32 %s43, %s44
      %p46 = scmp.eq.s32.totalorder %s45, 0
      %s48 = sadd.s32 %s47, 1
      %s49 = scalar_select %p46, %s47, %s48
      %p52 = pneg %p46
      %p53 = scmp.eq.s32.totalorder %s16, 1
      %p54 = por %p52, %p53
      %p55 = scmp.ne.s32.totalorder %s47, %s50
      %p56 = scmp.eq.s32.totalorder %s16, 0
      %p57 = por %p55, %p56
      %p58 = scmp.ne.s32.totalorder %s47, %s50
      %p59 = scmp.eq.s32.totalorder %s21, 1
      %p60 = por %p58, %p59
      %p61 = scmp.ne.s32.totalorder %s50, %s51
      %p62 = scmp.eq.s32.totalorder %s21, 0
      %p63 = por %p61, %p62
      %p64 = scmp.ne.s32.totalorder %s50, %s51
      %p65 = scmp.eq.s32.totalorder %s22, 1
      %p66 = por %p64, %p65
      %p68 = scmp.ne.s32.totalorder %s51, %s67
      %p69 = scmp.eq.s32.totalorder %s22, 0
      %p70 = por %p68, %p69
      %s71 = ssub.s32 %s25, %s34
      %s72 = ssub.s32 %s24, %s38
      %s73 = sor.u32 %s71, %s72
      %p74 = scmp.eq.s32.totalorder %s73, 0
      %s76 = sadd.s32 %s75, 1
      %s77 = scalar_select %p74, %s75, %s76
      %p80 = pneg %p74
      %p81 = scmp.eq.s32.totalorder %s16, 1
      %p82 = por %p80, %p81
      %p83 = scmp.ne.s32.totalorder %s75, %s78
      %p84 = scmp.eq.s32.totalorder %s16, 0
      %p85 = por %p83, %p84
      %p86 = scmp.ne.s32.totalorder %s75, %s78
      %p87 = scmp.eq.s32.totalorder %s21, 1
      %p88 = por %p86, %p87
      %p89 = scmp.ne.s32.totalorder %s78, %s79
      %p90 = scmp.eq.s32.totalorder %s21, 0
      %p91 = por %p89, %p90
      %p92 = scmp.ne.s32.totalorder %s78, %s79
      %p93 = scmp.eq.s32.totalorder %s22, 1
      %p94 = por %p92, %p93
      %p96 = scmp.ne.s32.totalorder %s79, %s95
      %p97 = scmp.eq.s32.totalorder %s22, 0
      %p98 = por %p96, %p97
      %s99 = ssub.s32 %s24, %s38
      %p100 = scmp.eq.s32.totalorder %s99, 0
      %s102 = sadd.s32 %s101, 1
      %s103 = scalar_select %p100, %s101, %s102
      %p106 = pneg %p100
      %p107 = scmp.eq.s32.totalorder %s16, 1
      %p108 = por %p106, %p107
      %p109 = scmp.ne.s32.totalorder %s101, %s104
      %p110 = scmp.eq.s32.totalorder %s16, 0
      %p111 = por %p109, %p110
      %p112 = scmp.ne.s32.totalorder %s101, %s104
      %p113 = scmp.eq.s32.totalorder %s21, 1
      %p114 = por %p112, %p113
      %p115 = scmp.ne.s32.totalorder %s104, %s105
      %p116 = scmp.eq.s32.totalorder %s21, 0
      %p117 = por %p115, %p116
      %p118 = scmp.ne.s32.totalorder %s104, %s105
      %p119 = scmp.eq.s32.totalorder %s22, 1
      %p120 = por %p118, %p119
      %p122 = scmp.ne.s32.totalorder %s105, %s121
      %p123 = scmp.eq.s32.totalorder %s22, 0
      %p124 = por %p122, %p123
      %s125 = ssub.s32 %s23, %s42
      %s126 = ssub.s32 %s24, %s38
      %s127 = sor.u32 %s125, %s126
      %p128 = scmp.eq.s32.totalorder %s127, 0
      %s130 = sadd.s32 %s129, 1
      %s131 = scalar_select %p128, %s129, %s130
      %p134 = pneg %p128
      %p135 = scmp.eq.s32.totalorder %s16, 1
      %p136 = por %p134, %p135
      %p137 = scmp.ne.s32.totalorder %s129, %s132
      %p138 = scmp.eq.s32.totalorder %s16, 0
      %p139 = por %p137, %p138
      %p140 = scmp.ne.s32.totalorder %s129, %s132
      %p141 = scmp.eq.s32.totalorder %s21, 1
      %p142 = por %p140, %p141
      %p143 = scmp.ne.s32.totalorder %s132, %s133
      %p144 = scmp.eq.s32.totalorder %s21, 0
      %p145 = por %p143, %p144
      %p146 = scmp.ne.s32.totalorder %s132, %s133
      %p147 = scmp.eq.s32.totalorder %s22, 1
      %p148 = por %p146, %p147
      %p150 = scmp.ne.s32.totalorder %s133, %s149
      %p151 = scmp.eq.s32.totalorder %s22, 0
      %p152 = por %p150, %p151
      %p153 = scmp.le.s32.totalorder 1, %s16
      %p154 = scmp.lt.s32.totalorder %s16, 3
      %p155 = pnand %p153, %p154
      %p156 = pneg %p155
      // Predicated region
      $region9: #{tpu_custom_call.1} parent=5 // pred_check
        _
      $region10: #{tpu_custom_call.1} parent=5 // pred_check_branch
        %158 = sbr.rel (%p155) target = $region12
      $region11: #{tpu_custom_call.1} parent=5 // pred_region
        %s159 = ssub.s32 %s16, 1
        // Predicated region
        $region13: #{tpu_custom_call.1} parent=11 // pred_check
          %p160 = pneg %p91
        $region14: #{tpu_custom_call.1} parent=11 // pred_check_branch
          %162 = sbr.rel (%p160) target = $region16
        $region15: #{tpu_custom_call.1} parent=11 // pred_region
          %s163 = smul.u32 48, %s28
          %s165 = ssub.s32 3072, 3072
          %166 = vsyncadd [#allocation7], %s165
          %s167 = sadd.s32 %s27, %s163
          %s168 = smul.addr %s167, 64
          %s169 = scalar_lea.hbm %s1, %s168
          %s170 = sshll.u32 [#allocation6], 4
          %s171 = int_to_ptr.vmem [resolvable:$true] %s170
          %176 = dma.hbm_to_vmem [thread:$0]  %s169, 3072, %s171, [#allocation7], 64, 64, 4
        $region16: #{tpu_custom_call.1} parent=11 // pred_fallthru
          _
        // Predicated region
        $region17: #{tpu_custom_call.1} parent=11 // pred_check
          %p177 = pneg %p117
        $region18: #{tpu_custom_call.1} parent=11 // pred_check_branch
          %179 = sbr.rel (%p177) target = $region20
        $region19: #{tpu_custom_call.1} parent=11 // pred_region
          %p180 = scmp.lt.s32.totalorder %s27, 0
          %s181 = scalar_select %p180, %s27, 0
          %s182 = scalar_lea.vmem %s2, %s181
        $region20: #{tpu_custom_call.1} parent=11 // pred_fallthru
          _
      $region12: #{tpu_custom_call.1} parent=5 // pred_fallthru
        _
      %p183 = scmp.lt.s32.totalorder %s16, 2
      // Predicated region
      $region21: #{tpu_custom_call.1} parent=5 // pred_check
        %p184 = pneg %p183
      $region22: #{tpu_custom_call.1} parent=5 // pred_check_branch
        %186 = sbr.rel (%p184) target = $region24
      $region23: #{tpu_custom_call.1} parent=5 // pred_region
        // Predicated region
        $region25: #{tpu_custom_call.1} parent=23 // pred_check
          %p187 = pneg %p57
        $region26: #{tpu_custom_call.1} parent=23 // pred_check_branch
          %189 = sbr.rel (%p187) target = $region28
        $region27: #{tpu_custom_call.1} parent=23 // pred_region
          %s190 = sand.u32 %s47, 1
          %s191 = scalar_lea.sflag [#allocation4], %s190
          %s192 = sand.u32 %s47, 1
          %s193 = smul.addr %s192, 768
          %s194 = scalar_lea.vmem [#allocation3], %s193
          %s195 = smul.u32 64, %s23
          %s196 = smul.u32 3, %s25
          %s198 = ssub.s32 12288, 12288
          %199 = vsyncadd %s191, %s198
          %s200 = smul.addr %s195, 3
          %s201 = sadd.s32 %s196, %s200
          %s202 = smul.addr %s201, 64
          %s203 = scalar_lea.hbm %s0, %s202
          %s204 = sshll.u32 %s194, 4
          %s205 = int_to_ptr.vmem [resolvable:$true] %s204
          %210 = dma.hbm_to_vmem [thread:$0]  %s203, 12288, %s205, %s191, 192, 192, 12
        $region28: #{tpu_custom_call.1} parent=23 // pred_fallthru
          _
      $region24: #{tpu_custom_call.1} parent=5 // pred_fallthru
        _
      %p211 = scmp.le.s32.totalorder 1, %s16
      %p212 = scmp.lt.s32.totalorder %s16, 3
      %p213 = pnand %p211, %p212
      %p214 = pneg %p213
      // Predicated region
      $region29: #{tpu_custom_call.1} parent=5 // pred_check
        _
      $region30: #{tpu_custom_call.1} parent=5 // pred_check_branch
        %216 = sbr.rel (%p213) target = $region32
      $region31: #{tpu_custom_call.1} parent=5 // pred_region
        %s217 = ssub.s32 %s16, 1
        %s218 = sand.u32 %s50, 1
        %s219 = scalar_lea.sflag [#allocation4], %s218
        %s220 = sand.u32 %s50, 1
        %s221 = smul.addr %s220, 768
        %s222 = scalar_lea.vmem [#allocation3], %s221
        // Predicated region
        $region33: #{tpu_custom_call.1} parent=31 // pred_check
          %p223 = pneg %p63
        $region34: #{tpu_custom_call.1} parent=31 // pred_check_branch
          %225 = sbr.rel (%p223) target = $region36
        $region35: #{tpu_custom_call.1} parent=31 // pred_region
          %226 = dma.done %s219, 12288
        $region36: #{tpu_custom_call.1} parent=31 // pred_fallthru
          _
        // Predicated region
        $region37: #{tpu_custom_call.1} parent=31 // pred_check
          %p227 = pneg %p91
        $region38: #{tpu_custom_call.1} parent=31 // pred_check_branch
          %229 = sbr.rel (%p227) target = $region40
        $region39: #{tpu_custom_call.1} parent=31 // pred_region
          %230 = dma.done [#allocation7], 3072
        $region40: #{tpu_custom_call.1} parent=31 // pred_fallthru
          _
        %s231 = sand.u32 %s50, 1
        %s232 = scalar_lea.sflag [#allocation4], %s231
        %s233 = sand.u32 %s50, 1
        %s234 = smul.addr %s233, 768
        %s235 = scalar_lea.vmem [#allocation3], %s234
        %p236 = pneg %p63
        %p237 = pneg %p60
        %p238 = pneg %p91
        %p239 = pneg %p88
        %p240 = scmp.lt.s32.totalorder %s27, 0
        %s241 = scalar_select %p240, %s27, 0
        %s242 = scalar_lea.vmem %s2, %s241
        %p243 = pneg %p117
        %p244 = pneg %p114
        %p245 = pneg %p145
        %p246 = pneg %p142
        %s247 = sand.u32 %s132, 1
        %s248 = scalar_lea.sflag [#allocation5], %s247
        %s249 = sand.u32 %s132, 1
        %s250 = smul.addr %s249, 256
        %s251 = scalar_lea.vmem [#allocation8], %s250
        %s252 = smul.u32 64, %s26
        %s253 = smul.u32 3, %s28
        %s254 = smul.u32 48, %s28
        %p255 = scmp.lt.s32.totalorder %s27, 0
        %s256 = scalar_select %p255, %s27, 0
        %s257 = scalar_lea.vmem %s2, %s256
        %s258 = smul.u32 64, %s26
        %p260 = scmp.eq.s32.totalorder %s28, 0
        // Predicated region
        $region41: #{tpu_custom_call.1} parent=31 // pred_check
          %p261 = pneg %p260
        $region42: #{tpu_custom_call.1} parent=31 // pred_check_branch
          %263 = sbr.rel (%p261) target = $region44
        $region43: #{tpu_custom_call.1} parent=31 // pred_region
          %264 = vst [vmem:[#allocation2] sm:$0xff] 0.0
          %265 = vst [vmem:[#allocation2 + $0x8] sm:$0xff] 0.0
          %266 = vst [vmem:[#allocation2 + $0x10] sm:$0xff] 0.0
          %267 = vst [vmem:[#allocation2 + $0x18] sm:$0xff] 0.0
          %268 = vst [vmem:[#allocation2 + $0x20] sm:$0xff] 0.0
          %269 = vst [vmem:[#allocation2 + $0x28] sm:$0xff] 0.0
          %270 = vst [vmem:[#allocation2 + $0x30] sm:$0xff] 0.0
          %271 = vst [vmem:[#allocation2 + $0x38] sm:$0xff] 0.0
          %272 = vst [vmem:[#allocation2 + $0x40] sm:$0xff] 0.0
          %273 = vst [vmem:[#allocation2 + $0x48] sm:$0xff] 0.0
          %274 = vst [vmem:[#allocation2 + $0x50] sm:$0xff] 0.0
          %275 = vst [vmem:[#allocation2 + $0x58] sm:$0xff] 0.0
          %276 = vst [vmem:[#allocation2 + $0x60] sm:$0xff] 0.0
          %277 = vst [vmem:[#allocation2 + $0x68] sm:$0xff] 0.0
          %278 = vst [vmem:[#allocation2 + $0x70] sm:$0xff] 0.0
          %279 = vst [vmem:[#allocation2 + $0x78] sm:$0xff] 0.0
          %280 = vst [vmem:[#allocation2 + $0x80] sm:$0xff] 0.0
          %281 = vst [vmem:[#allocation2 + $0x88] sm:$0xff] 0.0
          %282 = vst [vmem:[#allocation2 + $0x90] sm:$0xff] 0.0
          %283 = vst [vmem:[#allocation2 + $0x98] sm:$0xff] 0.0
          %284 = vst [vmem:[#allocation2 + $0xa0] sm:$0xff] 0.0
          %285 = vst [vmem:[#allocation2 + $0xa8] sm:$0xff] 0.0
          %286 = vst [vmem:[#allocation2 + $0xb0] sm:$0xff] 0.0
          %287 = vst [vmem:[#allocation2 + $0xb8] sm:$0xff] 0.0
          %288 = vst [vmem:[#allocation2 + $0xc0] sm:$0xff] 0.0
          %289 = vst [vmem:[#allocation2 + $0xc8] sm:$0xff] 0.0
          %290 = vst [vmem:[#allocation2 + $0xd0] sm:$0xff] 0.0
          %291 = vst [vmem:[#allocation2 + $0xd8] sm:$0xff] 0.0
          %292 = vst [vmem:[#allocation2 + $0xe0] sm:$0xff] 0.0
          %293 = vst [vmem:[#allocation2 + $0xe8] sm:$0xff] 0.0
          %294 = vst [vmem:[#allocation2 + $0xf0] sm:$0xff] 0.0
          %295 = vst [vmem:[#allocation2 + $0xf8] sm:$0xff] 0.0
          %296 = vst [vmem:[#allocation2 + $0x100] sm:$0xff] 0.0
          %297 = vst [vmem:[#allocation2 + $0x108] sm:$0xff] 0.0
          %298 = vst [vmem:[#allocation2 + $0x110] sm:$0xff] 0.0
          %299 = vst [vmem:[#allocation2 + $0x118] sm:$0xff] 0.0
          %300 = vst [vmem:[#allocation2 + $0x120] sm:$0xff] 0.0
          %301 = vst [vmem:[#allocation2 + $0x128] sm:$0xff] 0.0
          %302 = vst [vmem:[#allocation2 + $0x130] sm:$0xff] 0.0
          %303 = vst [vmem:[#allocation2 + $0x138] sm:$0xff] 0.0
          %304 = vst [vmem:[#allocation2 + $0x140] sm:$0xff] 0.0
          %305 = vst [vmem:[#allocation2 + $0x148] sm:$0xff] 0.0
          %306 = vst [vmem:[#allocation2 + $0x150] sm:$0xff] 0.0
          %307 = vst [vmem:[#allocation2 + $0x158] sm:$0xff] 0.0
          %308 = vst [vmem:[#allocation2 + $0x160] sm:$0xff] 0.0
          %309 = vst [vmem:[#allocation2 + $0x168] sm:$0xff] 0.0
          %310 = vst [vmem:[#allocation2 + $0x170] sm:$0xff] 0.0
          %311 = vst [vmem:[#allocation2 + $0x178] sm:$0xff] 0.0
          %312 = vst [vmem:[#allocation2 + $0x180] sm:$0xff] 0.0
          %313 = vst [vmem:[#allocation2 + $0x188] sm:$0xff] 0.0
          %314 = vst [vmem:[#allocation2 + $0x190] sm:$0xff] 0.0
          %315 = vst [vmem:[#allocation2 + $0x198] sm:$0xff] 0.0
          %316 = vst [vmem:[#allocation2 + $0x1a0] sm:$0xff] 0.0
          %317 = vst [vmem:[#allocation2 + $0x1a8] sm:$0xff] 0.0
          %318 = vst [vmem:[#allocation2 + $0x1b0] sm:$0xff] 0.0
          %319 = vst [vmem:[#allocation2 + $0x1b8] sm:$0xff] 0.0
          %320 = vst [vmem:[#allocation2 + $0x1c0] sm:$0xff] 0.0
          %321 = vst [vmem:[#allocation2 + $0x1c8] sm:$0xff] 0.0
          %322 = vst [vmem:[#allocation2 + $0x1d0] sm:$0xff] 0.0
          %323 = vst [vmem:[#allocation2 + $0x1d8] sm:$0xff] 0.0
          %324 = vst [vmem:[#allocation2 + $0x1e0] sm:$0xff] 0.0
          %325 = vst [vmem:[#allocation2 + $0x1e8] sm:$0xff] 0.0
          %326 = vst [vmem:[#allocation2 + $0x1f0] sm:$0xff] 0.0
          %327 = vst [vmem:[#allocation2 + $0x1f8] sm:$0xff] 0.0
        $region44: #{tpu_custom_call.1} parent=31 // pred_fallthru
          _
        %v328 = vld [vmem:[#allocation2] sm:$0xff]
        %v329 = vld [vmem:[#allocation2 + $0x8] sm:$0xff]
        %v330 = vld [vmem:[#allocation2 + $0x10] sm:$0xff]
        %v331 = vld [vmem:[#allocation2 + $0x18] sm:$0xff]
        %v332 = vld [vmem:[#allocation2 + $0x20] sm:$0xff]
        %v333 = vld [vmem:[#allocation2 + $0x28] sm:$0xff]
        %v334 = vld [vmem:[#allocation2 + $0x30] sm:$0xff]
        %v335 = vld [vmem:[#allocation2 + $0x38] sm:$0xff]
        %v336 = vld [vmem:[#allocation2 + $0x40] sm:$0xff]
        %v337 = vld [vmem:[#allocation2 + $0x48] sm:$0xff]
        %v338 = vld [vmem:[#allocation2 + $0x50] sm:$0xff]
        %v339 = vld [vmem:[#allocation2 + $0x58] sm:$0xff]
        %v340 = vld [vmem:[#allocation2 + $0x60] sm:$0xff]
        %v341 = vld [vmem:[#allocation2 + $0x68] sm:$0xff]
        %v342 = vld [vmem:[#allocation2 + $0x70] sm:$0xff]
        %v343 = vld [vmem:[#allocation2 + $0x78] sm:$0xff]
        %v344 = vld [vmem:[#allocation2 + $0x80] sm:$0xff]
        %v345 = vld [vmem:[#allocation2 + $0x88] sm:$0xff]
        %v346 = vld [vmem:[#allocation2 + $0x90] sm:$0xff]
        %v347 = vld [vmem:[#allocation2 + $0x98] sm:$0xff]
        %v348 = vld [vmem:[#allocation2 + $0xa0] sm:$0xff]
        %v349 = vld [vmem:[#allocation2 + $0xa8] sm:$0xff]
        %v350 = vld [vmem:[#allocation2 + $0xb0] sm:$0xff]
        %v351 = vld [vmem:[#allocation2 + $0xb8] sm:$0xff]
        %v352 = vld [vmem:[#allocation2 + $0xc0] sm:$0xff]
        %v353 = vld [vmem:[#allocation2 + $0xc8] sm:$0xff]
        %v354 = vld [vmem:[#allocation2 + $0xd0] sm:$0xff]
        %v355 = vld [vmem:[#allocation2 + $0xd8] sm:$0xff]
        %v356 = vld [vmem:[#allocation2 + $0xe0] sm:$0xff]
        %v357 = vld [vmem:[#allocation2 + $0xe8] sm:$0xff]
        %v358 = vld [vmem:[#allocation2 + $0xf0] sm:$0xff]
        %v359 = vld [vmem:[#allocation2 + $0xf8] sm:$0xff]
        %v360 = vld [vmem:[#allocation2 + $0x100] sm:$0xff]
        %v361 = vld [vmem:[#allocation2 + $0x108] sm:$0xff]
        %v362 = vld [vmem:[#allocation2 + $0x110] sm:$0xff]
        %v363 = vld [vmem:[#allocation2 + $0x118] sm:$0xff]
        %v364 = vld [vmem:[#allocation2 + $0x120] sm:$0xff]
        %v365 = vld [vmem:[#allocation2 + $0x128] sm:$0xff]
        %v366 = vld [vmem:[#allocation2 + $0x130] sm:$0xff]
        %v367 = vld [vmem:[#allocation2 + $0x138] sm:$0xff]
        %v368 = vld [vmem:[#allocation2 + $0x140] sm:$0xff]
        %v369 = vld [vmem:[#allocation2 + $0x148] sm:$0xff]
        %v370 = vld [vmem:[#allocation2 + $0x150] sm:$0xff]
        %v371 = vld [vmem:[#allocation2 + $0x158] sm:$0xff]
        %v372 = vld [vmem:[#allocation2 + $0x160] sm:$0xff]
        %v373 = vld [vmem:[#allocation2 + $0x168] sm:$0xff]
        %v374 = vld [vmem:[#allocation2 + $0x170] sm:$0xff]
        %v375 = vld [vmem:[#allocation2 + $0x178] sm:$0xff]
        %v376 = vld [vmem:[#allocation2 + $0x180] sm:$0xff]
        %v377 = vld [vmem:[#allocation2 + $0x188] sm:$0xff]
        %v378 = vld [vmem:[#allocation2 + $0x190] sm:$0xff]
        %v379 = vld [vmem:[#allocation2 + $0x198] sm:$0xff]
        %v380 = vld [vmem:[#allocation2 + $0x1a0] sm:$0xff]
        %v381 = vld [vmem:[#allocation2 + $0x1a8] sm:$0xff]
        %v382 = vld [vmem:[#allocation2 + $0x1b0] sm:$0xff]
        %v383 = vld [vmem:[#allocation2 + $0x1b8] sm:$0xff]
        %v384 = vld [vmem:[#allocation2 + $0x1c0] sm:$0xff]
        %v385 = vld [vmem:[#allocation2 + $0x1c8] sm:$0xff]
        %v386 = vld [vmem:[#allocation2 + $0x1d0] sm:$0xff]
        %v387 = vld [vmem:[#allocation2 + $0x1d8] sm:$0xff]
        %v388 = vld [vmem:[#allocation2 + $0x1e0] sm:$0xff]
        %v389 = vld [vmem:[#allocation2 + $0x1e8] sm:$0xff]
        %v390 = vld [vmem:[#allocation2 + $0x1f0] sm:$0xff]
        %v391 = vld [vmem:[#allocation2 + $0x1f8] sm:$0xff]
        %v392 = vld [vmem:[%s222] sm:$0xff]
        %v393 = vld [vmem:[%s222 + $0x8] sm:$0xf]
        %v394 = vld [vmem:[%s222 + $0xc] sm:$0xff]
        %v395 = vld [vmem:[%s222 + $0x14] sm:$0xf]
        %v396 = vld [vmem:[%s222 + $0x18] sm:$0xff]
        %v397 = vld [vmem:[%s222 + $0x20] sm:$0xf]
        %v398 = vld [vmem:[%s222 + $0x24] sm:$0xff]
        %v399 = vld [vmem:[%s222 + $0x2c] sm:$0xf]
        %v400 = vld [vmem:[%s222 + $0x30] sm:$0xff]
        %v401 = vld [vmem:[%s222 + $0x38] sm:$0xf]
        %v402 = vld [vmem:[%s222 + $0x3c] sm:$0xff]
        %v403 = vld [vmem:[%s222 + $0x44] sm:$0xf]
        %v404 = vld [vmem:[%s222 + $0x48] sm:$0xff]
        %v405 = vld [vmem:[%s222 + $0x50] sm:$0xf]
        %v406 = vld [vmem:[%s222 + $0x54] sm:$0xff]
        %v407 = vld [vmem:[%s222 + $0x5c] sm:$0xf]
        %v408 = vld [vmem:[%s222 + $0x60] sm:$0xff]
        %v409 = vld [vmem:[%s222 + $0x68] sm:$0xf]
        %v410 = vld [vmem:[%s222 + $0x6c] sm:$0xff]
        %v411 = vld [vmem:[%s222 + $0x74] sm:$0xf]
        %v412 = vld [vmem:[%s222 + $0x78] sm:$0xff]
        %v413 = vld [vmem:[%s222 + $0x80] sm:$0xf]
        %v414 = vld [vmem:[%s222 + $0x84] sm:$0xff]
        %v415 = vld [vmem:[%s222 + $0x8c] sm:$0xf]
        %v416 = vld [vmem:[%s222 + $0x90] sm:$0xff]
        %v417 = vld [vmem:[%s222 + $0x98] sm:$0xf]
        %v418 = vld [vmem:[%s222 + $0x9c] sm:$0xff]
        %v419 = vld [vmem:[%s222 + $0xa4] sm:$0xf]
        %v420 = vld [vmem:[%s222 + $0xa8] sm:$0xff]
        %v421 = vld [vmem:[%s222 + $0xb0] sm:$0xf]
        %v422 = vld [vmem:[%s222 + $0xb4] sm:$0xff]
        %v423 = vld [vmem:[%s222 + $0xbc] sm:$0xf]
        %v424 = vld [vmem:[%s222 + $0xc0] sm:$0xff]
        %v425 = vld [vmem:[%s222 + $0xc8] sm:$0xf]
        %v426 = vld [vmem:[%s222 + $0xcc] sm:$0xff]
        %v427 = vld [vmem:[%s222 + $0xd4] sm:$0xf]
        %v428 = vld [vmem:[%s222 + $0xd8] sm:$0xff]
        %v429 = vld [vmem:[%s222 + $0xe0] sm:$0xf]
        %v430 = vld [vmem:[%s222 + $0xe4] sm:$0xff]
        %v431 = vld [vmem:[%s222 + $0xec] sm:$0xf]
        %v432 = vld [vmem:[%s222 + $0xf0] sm:$0xff]
        %v433 = vld [vmem:[%s222 + $0xf8] sm:$0xf]
        %v434 = vld [vmem:[%s222 + $0xfc] sm:$0xff]
        %v435 = vld [vmem:[%s222 + $0x104] sm:$0xf]
        %v436 = vld [vmem:[%s222 + $0x108] sm:$0xff]
        %v437 = vld [vmem:[%s222 + $0x110] sm:$0xf]
        %v438 = vld [vmem:[%s222 + $0x114] sm:$0xff]
        %v439 = vld [vmem:[%s222 + $0x11c] sm:$0xf]
        %v440 = vld [vmem:[%s222 + $0x120] sm:$0xff]
        %v441 = vld [vmem:[%s222 + $0x128] sm:$0xf]
        %v442 = vld [vmem:[%s222 + $0x12c] sm:$0xff]
        %v443 = vld [vmem:[%s222 + $0x134] sm:$0xf]
        %v444 = vld [vmem:[%s222 + $0x138] sm:$0xff]
        %v445 = vld [vmem:[%s222 + $0x140] sm:$0xf]
        %v446 = vld [vmem:[%s222 + $0x144] sm:$0xff]
        %v447 = vld [vmem:[%s222 + $0x14c] sm:$0xf]
        %v448 = vld [vmem:[%s222 + $0x150] sm:$0xff]
        %v449 = vld [vmem:[%s222 + $0x158] sm:$0xf]
        %v450 = vld [vmem:[%s222 + $0x15c] sm:$0xff]
        %v451 = vld [vmem:[%s222 + $0x164] sm:$0xf]
        %v452 = vld [vmem:[%s222 + $0x168] sm:$0xff]
        %v453 = vld [vmem:[%s222 + $0x170] sm:$0xf]
        %v454 = vld [vmem:[%s222 + $0x174] sm:$0xff]
        %v455 = vld [vmem:[%s222 + $0x17c] sm:$0xf]
        %v456 = vld [vmem:[%s222 + $0x180] sm:$0xff]
        %v457 = vld [vmem:[%s222 + $0x188] sm:$0xf]
        %v458 = vld [vmem:[%s222 + $0x18c] sm:$0xff]
        %v459 = vld [vmem:[%s222 + $0x194] sm:$0xf]
        %v460 = vld [vmem:[%s222 + $0x198] sm:$0xff]
        %v461 = vld [vmem:[%s222 + $0x1a0] sm:$0xf]
        %v462 = vld [vmem:[%s222 + $0x1a4] sm:$0xff]
        %v463 = vld [vmem:[%s222 + $0x1ac] sm:$0xf]
        %v464 = vld [vmem:[%s222 + $0x1b0] sm:$0xff]
        %v465 = vld [vmem:[%s222 + $0x1b8] sm:$0xf]
        %v466 = vld [vmem:[%s222 + $0x1bc] sm:$0xff]
        %v467 = vld [vmem:[%s222 + $0x1c4] sm:$0xf]
        %v468 = vld [vmem:[%s222 + $0x1c8] sm:$0xff]
        %v469 = vld [vmem:[%s222 + $0x1d0] sm:$0xf]
        %v470 = vld [vmem:[%s222 + $0x1d4] sm:$0xff]
        %v471 = vld [vmem:[%s222 + $0x1dc] sm:$0xf]
        %v472 = vld [vmem:[%s222 + $0x1e0] sm:$0xff]
        %v473 = vld [vmem:[%s222 + $0x1e8] sm:$0xf]
        %v474 = vld [vmem:[%s222 + $0x1ec] sm:$0xff]
        %v475 = vld [vmem:[%s222 + $0x1f4] sm:$0xf]
        %v476 = vld [vmem:[%s222 + $0x1f8] sm:$0xff]
        %v477 = vld [vmem:[%s222 + $0x200] sm:$0xf]
        %v478 = vld [vmem:[%s222 + $0x204] sm:$0xff]
        %v479 = vld [vmem:[%s222 + $0x20c] sm:$0xf]
        %v480 = vld [vmem:[%s222 + $0x210] sm:$0xff]
        %v481 = vld [vmem:[%s222 + $0x218] sm:$0xf]
        %v482 = vld [vmem:[%s222 + $0x21c] sm:$0xff]
        %v483 = vld [vmem:[%s222 + $0x224] sm:$0xf]
        %v484 = vld [vmem:[%s222 + $0x228] sm:$0xff]
        %v485 = vld [vmem:[%s222 + $0x230] sm:$0xf]
        %v486 = vld [vmem:[%s222 + $0x234] sm:$0xff]
        %v487 = vld [vmem:[%s222 + $0x23c] sm:$0xf]
        %v488 = vld [vmem:[%s222 + $0x240] sm:$0xff]
        %v489 = vld [vmem:[%s222 + $0x248] sm:$0xf]
        %v490 = vld [vmem:[%s222 + $0x24c] sm:$0xff]
        %v491 = vld [vmem:[%s222 + $0x254] sm:$0xf]
        %v492 = vld [vmem:[%s222 + $0x258] sm:$0xff]
        %v493 = vld [vmem:[%s222 + $0x260] sm:$0xf]
        %v494 = vld [vmem:[%s222 + $0x264] sm:$0xff]
        %v495 = vld [vmem:[%s222 + $0x26c] sm:$0xf]
        %v496 = vld [vmem:[%s222 + $0x270] sm:$0xff]
        %v497 = vld [vmem:[%s222 + $0x278] sm:$0xf]
        %v498 = vld [vmem:[%s222 + $0x27c] sm:$0xff]
        %v499 = vld [vmem:[%s222 + $0x284] sm:$0xf]
        %v500 = vld [vmem:[%s222 + $0x288] sm:$0xff]
        %v501 = vld [vmem:[%s222 + $0x290] sm:$0xf]
        %v502 = vld [vmem:[%s222 + $0x294] sm:$0xff]
        %v503 = vld [vmem:[%s222 + $0x29c] sm:$0xf]
        %v504 = vld [vmem:[%s222 + $0x2a0] sm:$0xff]
        %v505 = vld [vmem:[%s222 + $0x2a8] sm:$0xf]
        %v506 = vld [vmem:[%s222 + $0x2ac] sm:$0xff]
        %v507 = vld [vmem:[%s222 + $0x2b4] sm:$0xf]
        %v508 = vld [vmem:[%s222 + $0x2b8] sm:$0xff]
        %v509 = vld [vmem:[%s222 + $0x2c0] sm:$0xf]
        %v510 = vld [vmem:[%s222 + $0x2c4] sm:$0xff]
        %v511 = vld [vmem:[%s222 + $0x2cc] sm:$0xf]
        %v512 = vld [vmem:[%s222 + $0x2d0] sm:$0xff]
        %v513 = vld [vmem:[%s222 + $0x2d8] sm:$0xf]
        %v514 = vld [vmem:[%s222 + $0x2dc] sm:$0xff]
        %v515 = vld [vmem:[%s222 + $0x2e4] sm:$0xf]
        %v516 = vld [vmem:[%s222 + $0x2e8] sm:$0xff]
        %v517 = vld [vmem:[%s222 + $0x2f0] sm:$0xf]
        %v518 = vld [vmem:[%s222 + $0x2f4] sm:$0xff]
        %v519 = vld [vmem:[%s222 + $0x2fc] sm:$0xf]
        %v520 = vld [vmem:[#allocation6] sm:$0xf]
        %v521 = vld [vmem:[#allocation6 + $0x4] sm:$0xf]
        %v522 = vld [vmem:[#allocation6 + $0x8] sm:$0xf]
        %v523 = vld [vmem:[#allocation6 + $0xc] sm:$0xf]
        %v524 = vld [vmem:[#allocation6 + $0x10] sm:$0xf]
        %v525 = vld [vmem:[#allocation6 + $0x14] sm:$0xf]
        %v526 = vld [vmem:[#allocation6 + $0x18] sm:$0xf]
        %v527 = vld [vmem:[#allocation6 + $0x1c] sm:$0xf]
        %v528 = vld [vmem:[#allocation6 + $0x20] sm:$0xf]
        %v529 = vld [vmem:[#allocation6 + $0x24] sm:$0xf]
        %v530 = vld [vmem:[#allocation6 + $0x28] sm:$0xf]
        %v531 = vld [vmem:[#allocation6 + $0x2c] sm:$0xf]
        %v532 = vld [vmem:[#allocation6 + $0x30] sm:$0xf]
        %v533 = vld [vmem:[#allocation6 + $0x34] sm:$0xf]
        %v534 = vld [vmem:[#allocation6 + $0x38] sm:$0xf]
        %v535 = vld [vmem:[#allocation6 + $0x3c] sm:$0xf]
        %v536 = vld [vmem:[#allocation6 + $0x40] sm:$0xf]
        %v537 = vld [vmem:[#allocation6 + $0x44] sm:$0xf]
        %v538 = vld [vmem:[#allocation6 + $0x48] sm:$0xf]
        %v539 = vld [vmem:[#allocation6 + $0x4c] sm:$0xf]
        %v540 = vld [vmem:[#allocation6 + $0x50] sm:$0xf]
        %v541 = vld [vmem:[#allocation6 + $0x54] sm:$0xf]
        %v542 = vld [vmem:[#allocation6 + $0x58] sm:$0xf]
        %v543 = vld [vmem:[#allocation6 + $0x5c] sm:$0xf]
        %v544 = vld [vmem:[#allocation6 + $0x60] sm:$0xf]
        %v545 = vld [vmem:[#allocation6 + $0x64] sm:$0xf]
        %v546 = vld [vmem:[#allocation6 + $0x68] sm:$0xf]
        %v547 = vld [vmem:[#allocation6 + $0x6c] sm:$0xf]
        %v548 = vld [vmem:[#allocation6 + $0x70] sm:$0xf]
        %v549 = vld [vmem:[#allocation6 + $0x74] sm:$0xf]
        %v550 = vld [vmem:[#allocation6 + $0x78] sm:$0xf]
        %v551 = vld [vmem:[#allocation6 + $0x7c] sm:$0xf]
        %v552 = vld [vmem:[#allocation6 + $0x80] sm:$0xf]
        %v553 = vld [vmem:[#allocation6 + $0x84] sm:$0xf]
        %v554 = vld [vmem:[#allocation6 + $0x88] sm:$0xf]
        %v555 = vld [vmem:[#allocation6 + $0x8c] sm:$0xf]
        %v556 = vld [vmem:[#allocation6 + $0x90] sm:$0xf]
        %v557 = vld [vmem:[#allocation6 + $0x94] sm:$0xf]
        %v558 = vld [vmem:[#allocation6 + $0x98] sm:$0xf]
        %v559 = vld [vmem:[#allocation6 + $0x9c] sm:$0xf]
        %v560 = vld [vmem:[#allocation6 + $0xa0] sm:$0xf]
        %v561 = vld [vmem:[#allocation6 + $0xa4] sm:$0xf]
        %v562 = vld [vmem:[#allocation6 + $0xa8] sm:$0xf]
        %v563 = vld [vmem:[#allocation6 + $0xac] sm:$0xf]
        %v564 = vld [vmem:[#allocation6 + $0xb0] sm:$0xf]
        %v565 = vld [vmem:[#allocation6 + $0xb4] sm:$0xf]
        %v566 = vld [vmem:[#allocation6 + $0xb8] sm:$0xf]
        %v567 = vld [vmem:[#allocation6 + $0xbc] sm:$0xf]
        %v696 = vunpack.c.l.b16 %v392
        %v697 = vunpack.c.h.b16 %v392
        %v698 = vunpack.c.l.b16 %v393
        %v699 = vunpack.c.l.b16 %v394
        %v700 = vunpack.c.h.b16 %v394
        %v701 = vunpack.c.l.b16 %v395
        %v702 = vunpack.c.l.b16 %v396
        %v703 = vunpack.c.h.b16 %v396
        %v704 = vunpack.c.l.b16 %v397
        %v705 = vunpack.c.l.b16 %v398
        %v706 = vunpack.c.h.b16 %v398
        %v707 = vunpack.c.l.b16 %v399
        %v708 = vunpack.c.l.b16 %v400
        %v709 = vunpack.c.h.b16 %v400
        %v710 = vunpack.c.l.b16 %v401
        %v711 = vunpack.c.l.b16 %v402
        %v712 = vunpack.c.h.b16 %v402
        %v713 = vunpack.c.l.b16 %v403
        %v714 = vunpack.c.l.b16 %v404
        %v715 = vunpack.c.h.b16 %v404
        %v716 = vunpack.c.l.b16 %v405
        %v717 = vunpack.c.l.b16 %v406
        %v718 = vunpack.c.h.b16 %v406
        %v719 = vunpack.c.l.b16 %v407
        %v720 = vunpack.c.l.b16 %v408
        %v721 = vunpack.c.h.b16 %v408
        %v722 = vunpack.c.l.b16 %v409
        %v723 = vunpack.c.l.b16 %v410
        %v724 = vunpack.c.h.b16 %v410
        %v725 = vunpack.c.l.b16 %v411
        %v726 = vunpack.c.l.b16 %v412
        %v727 = vunpack.c.h.b16 %v412
        %v728 = vunpack.c.l.b16 %v413
        %v729 = vunpack.c.l.b16 %v414
        %v730 = vunpack.c.h.b16 %v414
        %v731 = vunpack.c.l.b16 %v415
        %v732 = vunpack.c.l.b16 %v416
        %v733 = vunpack.c.h.b16 %v416
        %v734 = vunpack.c.l.b16 %v417
        %v735 = vunpack.c.l.b16 %v418
        %v736 = vunpack.c.h.b16 %v418
        %v737 = vunpack.c.l.b16 %v419
        %v738 = vunpack.c.l.b16 %v420
        %v739 = vunpack.c.h.b16 %v420
        %v740 = vunpack.c.l.b16 %v421
        %v741 = vunpack.c.l.b16 %v422
        %v742 = vunpack.c.h.b16 %v422
        %v743 = vunpack.c.l.b16 %v423
        %v744 = vunpack.c.l.b16 %v424
        %v745 = vunpack.c.h.b16 %v424
        %v746 = vunpack.c.l.b16 %v425
        %v747 = vunpack.c.l.b16 %v426
        %v748 = vunpack.c.h.b16 %v426
        %v749 = vunpack.c.l.b16 %v427
        %v750 = vunpack.c.l.b16 %v428
        %v751 = vunpack.c.h.b16 %v428
        %v752 = vunpack.c.l.b16 %v429
        %v753 = vunpack.c.l.b16 %v430
        %v754 = vunpack.c.h.b16 %v430
        %v755 = vunpack.c.l.b16 %v431
        %v756 = vunpack.c.l.b16 %v432
        %v757 = vunpack.c.h.b16 %v432
        %v758 = vunpack.c.l.b16 %v433
        %v759 = vunpack.c.l.b16 %v434
        %v760 = vunpack.c.h.b16 %v434
        %v761 = vunpack.c.l.b16 %v435
        %v762 = vunpack.c.l.b16 %v436
        %v763 = vunpack.c.h.b16 %v436
        %v764 = vunpack.c.l.b16 %v437
        %v765 = vunpack.c.l.b16 %v438
        %v766 = vunpack.c.h.b16 %v438
        %v767 = vunpack.c.l.b16 %v439
        %v768 = vunpack.c.l.b16 %v440
        %v769 = vunpack.c.h.b16 %v440
        %v770 = vunpack.c.l.b16 %v441
        %v771 = vunpack.c.l.b16 %v442
        %v772 = vunpack.c.h.b16 %v442
        %v773 = vunpack.c.l.b16 %v443
        %v774 = vunpack.c.l.b16 %v444
        %v775 = vunpack.c.h.b16 %v444
        %v776 = vunpack.c.l.b16 %v445
        %v777 = vunpack.c.l.b16 %v446
        %v778 = vunpack.c.h.b16 %v446
        %v779 = vunpack.c.l.b16 %v447
        %v780 = vunpack.c.l.b16 %v448
        %v781 = vunpack.c.h.b16 %v448
        %v782 = vunpack.c.l.b16 %v449
        %v783 = vunpack.c.l.b16 %v450
        %v784 = vunpack.c.h.b16 %v450
        %v785 = vunpack.c.l.b16 %v451
        %v786 = vunpack.c.l.b16 %v452
        %v787 = vunpack.c.h.b16 %v452
        %v788 = vunpack.c.l.b16 %v453
        %v789 = vunpack.c.l.b16 %v454
        %v790 = vunpack.c.h.b16 %v454
        %v791 = vunpack.c.l.b16 %v455
        %v792 = vunpack.c.l.b16 %v456
        %v793 = vunpack.c.h.b16 %v456
        %v794 = vunpack.c.l.b16 %v457
        %v795 = vunpack.c.l.b16 %v458
        %v796 = vunpack.c.h.b16 %v458
        %v797 = vunpack.c.l.b16 %v459
        %v798 = vunpack.c.l.b16 %v460
        %v799 = vunpack.c.h.b16 %v460
        %v800 = vunpack.c.l.b16 %v461
        %v801 = vunpack.c.l.b16 %v462
        %v802 = vunpack.c.h.b16 %v462
        %v803 = vunpack.c.l.b16 %v463
        %v804 = vunpack.c.l.b16 %v464
        %v805 = vunpack.c.h.b16 %v464
        %v806 = vunpack.c.l.b16 %v465
        %v807 = vunpack.c.l.b16 %v466
        %v808 = vunpack.c.h.b16 %v466
        %v809 = vunpack.c.l.b16 %v467
        %v810 = vunpack.c.l.b16 %v468
        %v811 = vunpack.c.h.b16 %v468
        %v812 = vunpack.c.l.b16 %v469
        %v813 = vunpack.c.l.b16 %v470
        %v814 = vunpack.c.h.b16 %v470
        %v815 = vunpack.c.l.b16 %v471
        %v816 = vunpack.c.l.b16 %v472
        %v817 = vunpack.c.h.b16 %v472
        %v818 = vunpack.c.l.b16 %v473
        %v819 = vunpack.c.l.b16 %v474
        %v820 = vunpack.c.h.b16 %v474
        %v821 = vunpack.c.l.b16 %v475
        %v822 = vunpack.c.l.b16 %v476
        %v823 = vunpack.c.h.b16 %v476
        %v824 = vunpack.c.l.b16 %v477
        %v825 = vunpack.c.l.b16 %v478
        %v826 = vunpack.c.h.b16 %v478
        %v827 = vunpack.c.l.b16 %v479
        %v828 = vunpack.c.l.b16 %v480
        %v829 = vunpack.c.h.b16 %v480
        %v830 = vunpack.c.l.b16 %v481
        %v831 = vunpack.c.l.b16 %v482
        %v832 = vunpack.c.h.b16 %v482
        %v833 = vunpack.c.l.b16 %v483
        %v834 = vunpack.c.l.b16 %v484
        %v835 = vunpack.c.h.b16 %v484
        %v836 = vunpack.c.l.b16 %v485
        %v837 = vunpack.c.l.b16 %v486
        %v838 = vunpack.c.h.b16 %v486
        %v839 = vunpack.c.l.b16 %v487
        %v840 = vunpack.c.l.b16 %v488
        %v841 = vunpack.c.h.b16 %v488
        %v842 = vunpack.c.l.b16 %v489
        %v843 = vunpack.c.l.b16 %v490
        %v844 = vunpack.c.h.b16 %v490
        %v845 = vunpack.c.l.b16 %v491
        %v846 = vunpack.c.l.b16 %v492
        %v847 = vunpack.c.h.b16 %v492
        %v848 = vunpack.c.l.b16 %v493
        %v849 = vunpack.c.l.b16 %v494
        %v850 = vunpack.c.h.b16 %v494
        %v851 = vunpack.c.l.b16 %v495
        %v852 = vunpack.c.l.b16 %v496
        %v853 = vunpack.c.h.b16 %v496
        %v854 = vunpack.c.l.b16 %v497
        %v855 = vunpack.c.l.b16 %v498
        %v856 = vunpack.c.h.b16 %v498
        %v857 = vunpack.c.l.b16 %v499
        %v858 = vunpack.c.l.b16 %v500
        %v859 = vunpack.c.h.b16 %v500
        %v860 = vunpack.c.l.b16 %v501
        %v861 = vunpack.c.l.b16 %v502
        %v862 = vunpack.c.h.b16 %v502
        %v863 = vunpack.c.l.b16 %v503
        %v864 = vunpack.c.l.b16 %v504
        %v865 = vunpack.c.h.b16 %v504
        %v866 = vunpack.c.l.b16 %v505
        %v867 = vunpack.c.l.b16 %v506
        %v868 = vunpack.c.h.b16 %v506
        %v869 = vunpack.c.l.b16 %v507
        %v870 = vunpack.c.l.b16 %v508
        %v871 = vunpack.c.h.b16 %v508
        %v872 = vunpack.c.l.b16 %v509
        %v873 = vunpack.c.l.b16 %v510
        %v874 = vunpack.c.h.b16 %v510
        %v875 = vunpack.c.l.b16 %v511
        %v876 = vunpack.c.l.b16 %v512
        %v877 = vunpack.c.h.b16 %v512
        %v878 = vunpack.c.l.b16 %v513
        %v879 = vunpack.c.l.b16 %v514
        %v880 = vunpack.c.h.b16 %v514
        %v881 = vunpack.c.l.b16 %v515
        %v882 = vunpack.c.l.b16 %v516
        %v883 = vunpack.c.h.b16 %v516
        %v884 = vunpack.c.l.b16 %v517
        %v885 = vunpack.c.l.b16 %v518
        %v886 = vunpack.c.h.b16 %v518
        %v887 = vunpack.c.l.b16 %v519
        %v888 = vpack.c.b16 %v699, %v696
        %v889 = vpack.c.b16 %v700, %v697
        %v890 = vpack.c.b16 %v701, %v698
        %v891 = vpack.c.b16 %v705, %v702
        %v892 = vpack.c.b16 %v706, %v703
        %v893 = vpack.c.b16 %v707, %v704
        %v894 = vpack.c.b16 %v711, %v708
        %v895 = vpack.c.b16 %v712, %v709
        %v896 = vpack.c.b16 %v713, %v710
        %v897 = vpack.c.b16 %v717, %v714
        %v898 = vpack.c.b16 %v718, %v715
        %v899 = vpack.c.b16 %v719, %v716
        %v900 = vpack.c.b16 %v723, %v720
        %v901 = vpack.c.b16 %v724, %v721
        %v902 = vpack.c.b16 %v725, %v722
        %v903 = vpack.c.b16 %v729, %v726
        %v904 = vpack.c.b16 %v730, %v727
        %v905 = vpack.c.b16 %v731, %v728
        %v906 = vpack.c.b16 %v735, %v732
        %v907 = vpack.c.b16 %v736, %v733
        %v908 = vpack.c.b16 %v737, %v734
        %v909 = vpack.c.b16 %v741, %v738
        %v910 = vpack.c.b16 %v742, %v739
        %v911 = vpack.c.b16 %v743, %v740
        %v912 = vpack.c.b16 %v747, %v744
        %v913 = vpack.c.b16 %v748, %v745
        %v914 = vpack.c.b16 %v749, %v746
        %v915 = vpack.c.b16 %v753, %v750
        %v916 = vpack.c.b16 %v754, %v751
        %v917 = vpack.c.b16 %v755, %v752
        %v918 = vpack.c.b16 %v759, %v756
        %v919 = vpack.c.b16 %v760, %v757
        %v920 = vpack.c.b16 %v761, %v758
        %v921 = vpack.c.b16 %v765, %v762
        %v922 = vpack.c.b16 %v766, %v763
        %v923 = vpack.c.b16 %v767, %v764
        %v924 = vpack.c.b16 %v771, %v768
        %v925 = vpack.c.b16 %v772, %v769
        %v926 = vpack.c.b16 %v773, %v770
        %v927 = vpack.c.b16 %v777, %v774
        %v928 = vpack.c.b16 %v778, %v775
        %v929 = vpack.c.b16 %v779, %v776
        %v930 = vpack.c.b16 %v783, %v780
        %v931 = vpack.c.b16 %v784, %v781
        %v932 = vpack.c.b16 %v785, %v782
        %v933 = vpack.c.b16 %v789, %v786
        %v934 = vpack.c.b16 %v790, %v787
        %v935 = vpack.c.b16 %v791, %v788
        %v936 = vpack.c.b16 %v795, %v792
        %v937 = vpack.c.b16 %v796, %v793
        %v938 = vpack.c.b16 %v797, %v794
        %v939 = vpack.c.b16 %v801, %v798
        %v940 = vpack.c.b16 %v802, %v799
        %v941 = vpack.c.b16 %v803, %v800
        %v942 = vpack.c.b16 %v807, %v804
        %v943 = vpack.c.b16 %v808, %v805
        %v944 = vpack.c.b16 %v809, %v806
        %v945 = vpack.c.b16 %v813, %v810
        %v946 = vpack.c.b16 %v814, %v811
        %v947 = vpack.c.b16 %v815, %v812
        %v948 = vpack.c.b16 %v819, %v816
        %v949 = vpack.c.b16 %v820, %v817
        %v950 = vpack.c.b16 %v821, %v818
        %v951 = vpack.c.b16 %v825, %v822
        %v952 = vpack.c.b16 %v826, %v823
        %v953 = vpack.c.b16 %v827, %v824
        %v954 = vpack.c.b16 %v831, %v828
        %v955 = vpack.c.b16 %v832, %v829
        %v956 = vpack.c.b16 %v833, %v830
        %v957 = vpack.c.b16 %v837, %v834
        %v958 = vpack.c.b16 %v838, %v835
        %v959 = vpack.c.b16 %v839, %v836
        %v960 = vpack.c.b16 %v843, %v840
        %v961 = vpack.c.b16 %v844, %v841
        %v962 = vpack.c.b16 %v845, %v842
        %v963 = vpack.c.b16 %v849, %v846
        %v964 = vpack.c.b16 %v850, %v847
        %v965 = vpack.c.b16 %v851, %v848
        %v966 = vpack.c.b16 %v855, %v852
        %v967 = vpack.c.b16 %v856, %v853
        %v968 = vpack.c.b16 %v857, %v854
        %v969 = vpack.c.b16 %v861, %v858
        %v970 = vpack.c.b16 %v862, %v859
        %v971 = vpack.c.b16 %v863, %v860
        %v972 = vpack.c.b16 %v867, %v864
        %v973 = vpack.c.b16 %v868, %v865
        %v974 = vpack.c.b16 %v869, %v866
        %v975 = vpack.c.b16 %v873, %v870
        %v976 = vpack.c.b16 %v874, %v871
        %v977 = vpack.c.b16 %v875, %v872
        %v978 = vpack.c.b16 %v879, %v876
        %v979 = vpack.c.b16 %v880, %v877
        %v980 = vpack.c.b16 %v881, %v878
        %v981 = vpack.c.b16 %v885, %v882
        %v982 = vpack.c.b16 %v886, %v883
        %v983 = vpack.c.b16 %v887, %v884
        %v1128 = vunpack.c.l.b16 %v520
        %v1129 = vunpack.c.l.b16 %v521
        %v1130 = vunpack.c.l.b16 %v522
        %v1131 = vunpack.c.l.b16 %v523
        %v1132 = vunpack.c.l.b16 %v524
        %v1133 = vunpack.c.l.b16 %v525
        %v1134 = vunpack.c.l.b16 %v526
        %v1135 = vunpack.c.l.b16 %v527
        %v1136 = vunpack.c.l.b16 %v528
        %v1137 = vunpack.c.l.b16 %v529
        %v1138 = vunpack.c.l.b16 %v530
        %v1139 = vunpack.c.l.b16 %v531
        %v1140 = vunpack.c.l.b16 %v532
        %v1141 = vunpack.c.l.b16 %v533
        %v1142 = vunpack.c.l.b16 %v534
        %v1143 = vunpack.c.l.b16 %v535
        %v1144 = vunpack.c.l.b16 %v536
        %v1145 = vunpack.c.l.b16 %v537
        %v1146 = vunpack.c.l.b16 %v538
        %v1147 = vunpack.c.l.b16 %v539
        %v1148 = vunpack.c.l.b16 %v540
        %v1149 = vunpack.c.l.b16 %v541
        %v1150 = vunpack.c.l.b16 %v542
        %v1151 = vunpack.c.l.b16 %v543
        %v1152 = vunpack.c.l.b16 %v544
        %v1153 = vunpack.c.l.b16 %v545
        %v1154 = vunpack.c.l.b16 %v546
        %v1155 = vunpack.c.l.b16 %v547
        %v1156 = vunpack.c.l.b16 %v548
        %v1157 = vunpack.c.l.b16 %v549
        %v1158 = vunpack.c.l.b16 %v550
        %v1159 = vunpack.c.l.b16 %v551
        %v1160 = vunpack.c.l.b16 %v552
        %v1161 = vunpack.c.l.b16 %v553
        %v1162 = vunpack.c.l.b16 %v554
        %v1163 = vunpack.c.l.b16 %v555
        %v1164 = vunpack.c.l.b16 %v556
        %v1165 = vunpack.c.l.b16 %v557
        %v1166 = vunpack.c.l.b16 %v558
        %v1167 = vunpack.c.l.b16 %v559
        %v1168 = vunpack.c.l.b16 %v560
        %v1169 = vunpack.c.l.b16 %v561
        %v1170 = vunpack.c.l.b16 %v562
        %v1171 = vunpack.c.l.b16 %v563
        %v1172 = vunpack.c.l.b16 %v564
        %v1173 = vunpack.c.l.b16 %v565
        %v1174 = vunpack.c.l.b16 %v566
        %v1175 = vunpack.c.l.b16 %v567
        %v1176 = vpack.c.b16 %v1129, %v1128
        %v1177 = vpack.c.b16 %v1131, %v1130
        %v1178 = vpack.c.b16 %v1133, %v1132
        %v1179 = vpack.c.b16 %v1135, %v1134
        %v1180 = vpack.c.b16 %v1137, %v1136
        %v1181 = vpack.c.b16 %v1139, %v1138
        %v1182 = vpack.c.b16 %v1141, %v1140
        %v1183 = vpack.c.b16 %v1143, %v1142
        %v1184 = vpack.c.b16 %v1145, %v1144
        %v1185 = vpack.c.b16 %v1147, %v1146
        %v1186 = vpack.c.b16 %v1149, %v1148
        %v1187 = vpack.c.b16 %v1151, %v1150
        %v1188 = vpack.c.b16 %v1153, %v1152
        %v1189 = vpack.c.b16 %v1155, %v1154
        %v1190 = vpack.c.b16 %v1157, %v1156
        %v1191 = vpack.c.b16 %v1159, %v1158
        %v1192 = vpack.c.b16 %v1161, %v1160
        %v1193 = vpack.c.b16 %v1163, %v1162
        %v1194 = vpack.c.b16 %v1165, %v1164
        %v1195 = vpack.c.b16 %v1167, %v1166
        %v1196 = vpack.c.b16 %v1169, %v1168
        %v1197 = vpack.c.b16 %v1171, %v1170
        %v1198 = vpack.c.b16 %v1173, %v1172
        %v1199 = vpack.c.b16 %v1175, %v1174
        %1224 = vmatprep.subr.bf16.mxu0 0
        %1225 = vmatpush1.bf16.msra.mxu0 %v1183
        %1226 = vmatprep.subr.bf16.mxu0 0
        %1227 = vmatpush1.bf16.msra.mxu0 %v1182
        %1228 = vmatprep.subr.bf16.mxu0 0
        %1229 = vmatpush1.bf16.msra.mxu0 %v1181
        %1230 = vmatprep.subr.bf16.mxu0 0
        %1231 = vmatpush1.bf16.msra.mxu0 %v1180
        %1232 = vmatprep.subr.bf16.mxu0 0
        %1233 = vmatpush1.bf16.msra.mxu0 %v1179
        %1234 = vmatprep.subr.bf16.mxu0 0
        %1235 = vmatpush1.bf16.msra.mxu0 %v1178
        %1236 = vmatprep.subr.bf16.mxu0 0
        %1237 = vmatpush1.bf16.msra.mxu0 %v1177
        %1238 = vmatprep.subr.bf16.mxu0 0
        %1239 = vmatpush1.bf16.msra.mxu0 %v1176
        %1240 = vmatprep.subr.bf16.mxu0 0
        %1241 = vmatpush2.bf16.msra.mxu0 %v1191
        %1242 = vmatprep.subr.bf16.mxu0 0
        %1243 = vmatpush2.bf16.msra.mxu0 %v1190
        %1244 = vmatprep.subr.bf16.mxu0 0
        %1245 = vmatpush2.bf16.msra.mxu0 %v1189
        %1246 = vmatprep.subr.bf16.mxu0 0
        %1247 = vmatpush2.bf16.msra.mxu0 %v1188
        %1248 = vmatprep.subr.bf16.mxu0 0
        %1249 = vmatpush2.bf16.msra.mxu0 %v1187
        %1250 = vmatprep.subr.bf16.mxu0 0
        %1251 = vmatpush2.bf16.msra.mxu0 %v1186
        %1252 = vmatprep.subr.bf16.mxu0 0
        %1253 = vmatpush2.bf16.msra.mxu0 %v1185
        %1254 = vmatprep.subr.bf16.mxu0 0
        %1255 = vmatpush2.bf16.msra.mxu0 %v1184
        %1256 = vmatprep.mubr.bf16.mxu0 %v889
        %1257 = vmatmul.mubr.bf16.gmra.mxu0 %v888
        %v1258 = vpop.f32.mrf.mxu0
        %v1259 = vadd.f32 0.0, %v1258
        %v1260 = vpop.f32.mrf.mxu0
        %v1261 = vpop.f32.mrf.mxu0
        %v1262 = vadd.f32 0.0, %v1261
        %v1263 = vpop.f32.mrf.mxu0
        %1264 = vmatprep.mubr.bf16.mxu0 %v892
        %1265 = vmatmul.mubr.bf16.gmra.mxu0 %v891
        %v1266 = vpop.f32.mrf.mxu0
        %v1267 = vadd.f32 0.0, %v1266
        %v1268 = vpop.f32.mrf.mxu0
        %v1269 = vpop.f32.mrf.mxu0
        %v1270 = vadd.f32 0.0, %v1269
        %v1271 = vpop.f32.mrf.mxu0
        %1272 = vmatprep.mubr.bf16.mxu0 %v895
        %1273 = vmatmul.mubr.bf16.gmra.mxu0 %v894
        %v1274 = vpop.f32.mrf.mxu0
        %v1275 = vadd.f32 0.0, %v1274
        %v1276 = vpop.f32.mrf.mxu0
        %v1277 = vpop.f32.mrf.mxu0
        %v1278 = vadd.f32 0.0, %v1277
        %v1279 = vpop.f32.mrf.mxu0
        %1280 = vmatprep.mubr.bf16.mxu0 %v898
        %1281 = vmatmul.mubr.bf16.gmra.mxu0 %v897
        %v1282 = vpop.f32.mrf.mxu0
        %v1283 = vadd.f32 0.0, %v1282
        %v1284 = vpop.f32.mrf.mxu0
        %v1285 = vpop.f32.mrf.mxu0
        %v1286 = vadd.f32 0.0, %v1285
        %v1287 = vpop.f32.mrf.mxu0
        %1288 = vmatprep.mubr.bf16.mxu0 %v901
        %1289 = vmatmul.mubr.bf16.gmra.mxu0 %v900
        %v1290 = vpop.f32.mrf.mxu0
        %v1291 = vadd.f32 0.0, %v1290
        %v1292 = vpop.f32.mrf.mxu0
        %v1293 = vpop.f32.mrf.mxu0
        %v1294 = vadd.f32 0.0, %v1293
        %v1295 = vpop.f32.mrf.mxu0
        %1296 = vmatprep.mubr.bf16.mxu0 %v904
        %1297 = vmatmul.mubr.bf16.gmra.mxu0 %v903
        %v1298 = vpop.f32.mrf.mxu0
        %v1299 = vadd.f32 0.0, %v1298
        %v1300 = vpop.f32.mrf.mxu0
        %v1301 = vpop.f32.mrf.mxu0
        %v1302 = vadd.f32 0.0, %v1301
        %v1303 = vpop.f32.mrf.mxu0
        %1304 = vmatprep.mubr.bf16.mxu0 %v907
        %1305 = vmatmul.mubr.bf16.gmra.mxu0 %v906
        %v1306 = vpop.f32.mrf.mxu0
        %v1307 = vadd.f32 0.0, %v1306
        %v1308 = vpop.f32.mrf.mxu0
        %v1309 = vpop.f32.mrf.mxu0
        %v1310 = vadd.f32 0.0, %v1309
        %v1311 = vpop.f32.mrf.mxu0
        %1312 = vmatprep.mubr.bf16.mxu0 %v910
        %1313 = vmatmul.mubr.bf16.gmra.mxu0 %v909
        %v1314 = vpop.f32.mrf.mxu0
        %v1315 = vadd.f32 0.0, %v1314
        %v1316 = vpop.f32.mrf.mxu0
        %v1317 = vpop.f32.mrf.mxu0
        %v1318 = vadd.f32 0.0, %v1317
        %v1319 = vpop.f32.mrf.mxu0
        %1320 = vmatprep.mubr.bf16.mxu0 %v913
        %1321 = vmatmul.mubr.bf16.gmra.mxu0 %v912
        %v1322 = vpop.f32.mrf.mxu0
        %v1323 = vadd.f32 0.0, %v1322
        %v1324 = vpop.f32.mrf.mxu0
        %v1325 = vpop.f32.mrf.mxu0
        %v1326 = vadd.f32 0.0, %v1325
        %v1327 = vpop.f32.mrf.mxu0
        %1328 = vmatprep.mubr.bf16.mxu0 %v916
        %1329 = vmatmul.mubr.bf16.gmra.mxu0 %v915
        %v1330 = vpop.f32.mrf.mxu0
        %v1331 = vadd.f32 0.0, %v1330
        %v1332 = vpop.f32.mrf.mxu0
        %v1333 = vpop.f32.mrf.mxu0
        %v1334 = vadd.f32 0.0, %v1333
        %v1335 = vpop.f32.mrf.mxu0
        %1336 = vmatprep.mubr.bf16.mxu0 %v919
        %1337 = vmatmul.mubr.bf16.gmra.mxu0 %v918
        %v1338 = vpop.f32.mrf.mxu0
        %v1339 = vadd.f32 0.0, %v1338
        %v1340 = vpop.f32.mrf.mxu0
        %v1341 = vpop.f32.mrf.mxu0
        %v1342 = vadd.f32 0.0, %v1341
        %v1343 = vpop.f32.mrf.mxu0
        %1344 = vmatprep.mubr.bf16.mxu0 %v922
        %1345 = vmatmul.mubr.bf16.gmra.mxu0 %v921
        %v1346 = vpop.f32.mrf.mxu0
        %v1347 = vadd.f32 0.0, %v1346
        %v1348 = vpop.f32.mrf.mxu0
        %v1349 = vpop.f32.mrf.mxu0
        %v1350 = vadd.f32 0.0, %v1349
        %v1351 = vpop.f32.mrf.mxu0
        %1352 = vmatprep.mubr.bf16.mxu0 %v925
        %1353 = vmatmul.mubr.bf16.gmra.mxu0 %v924
        %v1354 = vpop.f32.mrf.mxu0
        %v1355 = vadd.f32 0.0, %v1354
        %v1356 = vpop.f32.mrf.mxu0
        %v1357 = vpop.f32.mrf.mxu0
        %v1358 = vadd.f32 0.0, %v1357
        %v1359 = vpop.f32.mrf.mxu0
        %1360 = vmatprep.mubr.bf16.mxu0 %v928
        %1361 = vmatmul.mubr.bf16.gmra.mxu0 %v927
        %v1362 = vpop.f32.mrf.mxu0
        %v1363 = vadd.f32 0.0, %v1362
        %v1364 = vpop.f32.mrf.mxu0
        %v1365 = vpop.f32.mrf.mxu0
        %v1366 = vadd.f32 0.0, %v1365
        %v1367 = vpop.f32.mrf.mxu0
        %1368 = vmatprep.mubr.bf16.mxu0 %v931
        %1369 = vmatmul.mubr.bf16.gmra.mxu0 %v930
        %v1370 = vpop.f32.mrf.mxu0
        %v1371 = vadd.f32 0.0, %v1370
        %v1372 = vpop.f32.mrf.mxu0
        %v1373 = vpop.f32.mrf.mxu0
        %v1374 = vadd.f32 0.0, %v1373
        %v1375 = vpop.f32.mrf.mxu0
        %1376 = vmatprep.mubr.bf16.mxu0 %v934
        %1377 = vmatmul.mubr.bf16.gmra.mxu0 %v933
        %v1378 = vpop.f32.mrf.mxu0
        %v1379 = vadd.f32 0.0, %v1378
        %v1380 = vpop.f32.mrf.mxu0
        %v1381 = vpop.f32.mrf.mxu0
        %v1382 = vadd.f32 0.0, %v1381
        %v1383 = vpop.f32.mrf.mxu0
        %1384 = vmatprep.mubr.bf16.mxu0 %v937
        %1385 = vmatmul.mubr.bf16.gmra.mxu0 %v936
        %v1386 = vpop.f32.mrf.mxu0
        %v1387 = vadd.f32 0.0, %v1386
        %v1388 = vpop.f32.mrf.mxu0
        %v1389 = vpop.f32.mrf.mxu0
        %v1390 = vadd.f32 0.0, %v1389
        %v1391 = vpop.f32.mrf.mxu0
        %1392 = vmatprep.mubr.bf16.mxu0 %v940
        %1393 = vmatmul.mubr.bf16.gmra.mxu0 %v939
        %v1394 = vpop.f32.mrf.mxu0
        %v1395 = vadd.f32 0.0, %v1394
        %v1396 = vpop.f32.mrf.mxu0
        %v1397 = vpop.f32.mrf.mxu0
        %v1398 = vadd.f32 0.0, %v1397
        %v1399 = vpop.f32.mrf.mxu0
        %1400 = vmatprep.mubr.bf16.mxu0 %v943
        %1401 = vmatmul.mubr.bf16.gmra.mxu0 %v942
        %v1402 = vpop.f32.mrf.mxu0
        %v1403 = vadd.f32 0.0, %v1402
        %v1404 = vpop.f32.mrf.mxu0
        %v1405 = vpop.f32.mrf.mxu0
        %v1406 = vadd.f32 0.0, %v1405
        %v1407 = vpop.f32.mrf.mxu0
        %1408 = vmatprep.mubr.bf16.mxu0 %v946
        %1409 = vmatmul.mubr.bf16.gmra.mxu0 %v945
        %v1410 = vpop.f32.mrf.mxu0
        %v1411 = vadd.f32 0.0, %v1410
        %v1412 = vpop.f32.mrf.mxu0
        %v1413 = vpop.f32.mrf.mxu0
        %v1414 = vadd.f32 0.0, %v1413
        %v1415 = vpop.f32.mrf.mxu0
        %1416 = vmatprep.mubr.bf16.mxu0 %v949
        %1417 = vmatmul.mubr.bf16.gmra.mxu0 %v948
        %v1418 = vpop.f32.mrf.mxu0
        %v1419 = vadd.f32 0.0, %v1418
        %v1420 = vpop.f32.mrf.mxu0
        %v1421 = vpop.f32.mrf.mxu0
        %v1422 = vadd.f32 0.0, %v1421
        %v1423 = vpop.f32.mrf.mxu0
        %1424 = vmatprep.mubr.bf16.mxu0 %v952
        %1425 = vmatmul.mubr.bf16.gmra.mxu0 %v951
        %v1426 = vpop.f32.mrf.mxu0
        %v1427 = vadd.f32 0.0, %v1426
        %v1428 = vpop.f32.mrf.mxu0
        %v1429 = vpop.f32.mrf.mxu0
        %v1430 = vadd.f32 0.0, %v1429
        %v1431 = vpop.f32.mrf.mxu0
        %1432 = vmatprep.mubr.bf16.mxu0 %v955
        %1433 = vmatmul.mubr.bf16.gmra.mxu0 %v954
        %v1434 = vpop.f32.mrf.mxu0
        %v1435 = vadd.f32 0.0, %v1434
        %v1436 = vpop.f32.mrf.mxu0
        %v1437 = vpop.f32.mrf.mxu0
        %v1438 = vadd.f32 0.0, %v1437
        %v1439 = vpop.f32.mrf.mxu0
        %1440 = vmatprep.mubr.bf16.mxu0 %v958
        %1441 = vmatmul.mubr.bf16.gmra.mxu0 %v957
        %v1442 = vpop.f32.mrf.mxu0
        %v1443 = vadd.f32 0.0, %v1442
        %v1444 = vpop.f32.mrf.mxu0
        %v1445 = vpop.f32.mrf.mxu0
        %v1446 = vadd.f32 0.0, %v1445
        %v1447 = vpop.f32.mrf.mxu0
        %1448 = vmatprep.mubr.bf16.mxu0 %v961
        %1449 = vmatmul.mubr.bf16.gmra.mxu0 %v960
        %v1450 = vpop.f32.mrf.mxu0
        %v1451 = vadd.f32 0.0, %v1450
        %v1452 = vpop.f32.mrf.mxu0
        %v1453 = vpop.f32.mrf.mxu0
        %v1454 = vadd.f32 0.0, %v1453
        %v1455 = vpop.f32.mrf.mxu0
        %1456 = vmatprep.mubr.bf16.mxu0 %v964
        %1457 = vmatmul.mubr.bf16.gmra.mxu0 %v963
        %v1458 = vpop.f32.mrf.mxu0
        %v1459 = vadd.f32 0.0, %v1458
        %v1460 = vpop.f32.mrf.mxu0
        %v1461 = vpop.f32.mrf.mxu0
        %v1462 = vadd.f32 0.0, %v1461
        %v1463 = vpop.f32.mrf.mxu0
        %1464 = vmatprep.mubr.bf16.mxu0 %v967
        %1465 = vmatmul.mubr.bf16.gmra.mxu0 %v966
        %v1466 = vpop.f32.mrf.mxu0
        %v1467 = vadd.f32 0.0, %v1466
        %v1468 = vpop.f32.mrf.mxu0
        %v1469 = vpop.f32.mrf.mxu0
        %v1470 = vadd.f32 0.0, %v1469
        %v1471 = vpop.f32.mrf.mxu0
        %1472 = vmatprep.mubr.bf16.mxu0 %v970
        %1473 = vmatmul.mubr.bf16.gmra.mxu0 %v969
        %v1474 = vpop.f32.mrf.mxu0
        %v1475 = vadd.f32 0.0, %v1474
        %v1476 = vpop.f32.mrf.mxu0
        %v1477 = vpop.f32.mrf.mxu0
        %v1478 = vadd.f32 0.0, %v1477
        %v1479 = vpop.f32.mrf.mxu0
        %1480 = vmatprep.mubr.bf16.mxu0 %v973
        %1481 = vmatmul.mubr.bf16.gmra.mxu0 %v972
        %v1482 = vpop.f32.mrf.mxu0
        %v1483 = vadd.f32 0.0, %v1482
        %v1484 = vpop.f32.mrf.mxu0
        %v1485 = vpop.f32.mrf.mxu0
        %v1486 = vadd.f32 0.0, %v1485
        %v1487 = vpop.f32.mrf.mxu0
        %1488 = vmatprep.mubr.bf16.mxu0 %v976
        %1489 = vmatmul.mubr.bf16.gmra.mxu0 %v975
        %v1490 = vpop.f32.mrf.mxu0
        %v1491 = vadd.f32 0.0, %v1490
        %v1492 = vpop.f32.mrf.mxu0
        %v1493 = vpop.f32.mrf.mxu0
        %v1494 = vadd.f32 0.0, %v1493
        %v1495 = vpop.f32.mrf.mxu0
        %1496 = vmatprep.mubr.bf16.mxu0 %v979
        %1497 = vmatmul.mubr.bf16.gmra.mxu0 %v978
        %v1498 = vpop.f32.mrf.mxu0
        %v1499 = vadd.f32 0.0, %v1498
        %v1500 = vpop.f32.mrf.mxu0
        %v1501 = vpop.f32.mrf.mxu0
        %v1502 = vadd.f32 0.0, %v1501
        %v1503 = vpop.f32.mrf.mxu0
        %1504 = vmatprep.mubr.bf16.mxu0 %v982
        %1505 = vmatmul.mubr.bf16.gmra.mxu0 %v981
        %v1506 = vpop.f32.mrf.mxu0
        %v1507 = vadd.f32 0.0, %v1506
        %v1508 = vpop.f32.mrf.mxu0
        %v1509 = vpop.f32.mrf.mxu0
        %v1510 = vadd.f32 0.0, %v1509
        %v1511 = vpop.f32.mrf.mxu0
        %1512 = vdwg.mxu0
        %1513 = vmatprep.subr.bf16.mxu0 0
        %1514 = vmatpush1.bf16.msra.mxu0 %v1199
        %1515 = vmatprep.subr.bf16.mxu0 0
        %1516 = vmatpush1.bf16.msra.mxu0 %v1198
        %1517 = vmatprep.subr.bf16.mxu0 0
        %1518 = vmatpush1.bf16.msra.mxu0 %v1197
        %1519 = vmatprep.subr.bf16.mxu0 0
        %1520 = vmatpush1.bf16.msra.mxu0 %v1196
        %1521 = vmatprep.subr.bf16.mxu0 0
        %1522 = vmatpush1.bf16.msra.mxu0 %v1195
        %1523 = vmatprep.subr.bf16.mxu0 0
        %1524 = vmatpush1.bf16.msra.mxu0 %v1194
        %1525 = vmatprep.subr.bf16.mxu0 0
        %1526 = vmatpush1.bf16.msra.mxu0 %v1193
        %1527 = vmatprep.subr.bf16.mxu0 0
        %1528 = vmatpush1.bf16.msra.mxu0 %v1192
        %1529 = vmatprep.subr.bf16.mxu0 0
        %1530 = vmatpush2.bf16.msra.mxu0 0
        %1531 = vmatprep.subr.bf16.mxu0 0
        %1532 = vmatpush2.bf16.msra.mxu0 0
        %1533 = vmatprep.subr.bf16.mxu0 0
        %1534 = vmatpush2.bf16.msra.mxu0 0
        %1535 = vmatprep.subr.bf16.mxu0 0
        %1536 = vmatpush2.bf16.msra.mxu0 0
        %1537 = vmatprep.subr.bf16.mxu0 0
        %1538 = vmatpush2.bf16.msra.mxu0 0
        %1539 = vmatprep.subr.bf16.mxu0 0
        %1540 = vmatpush2.bf16.msra.mxu0 0
        %1541 = vmatprep.subr.bf16.mxu0 0
        %1542 = vmatpush2.bf16.msra.mxu0 0
        %1543 = vmatprep.subr.bf16.mxu0 0
        %1544 = vmatpush2.bf16.msra.mxu0 0
        %1545 = vmatprep.mubr.bf16.mxu0 0
        %1546 = vmatmul.mubr.bf16.gmra.mxu0 %v890
        %v1547 = vpop.f32.mrf.mxu0
        %v1548 = vadd.f32 %v1259, %v1547
        %v1549 = vpop.f32.mrf.mxu0
        %v1550 = vpop.f32.mrf.mxu0
        %v1551 = vadd.f32 %v1262, %v1550
        %v1552 = vpop.f32.mrf.mxu0
        %1553 = vmatprep.mubr.bf16.mxu0 0
        %1554 = vmatmul.mubr.bf16.gmra.mxu0 %v893
        %v1555 = vpop.f32.mrf.mxu0
        %v1556 = vadd.f32 %v1267, %v1555
        %v1557 = vpop.f32.mrf.mxu0
        %v1558 = vpop.f32.mrf.mxu0
        %v1559 = vadd.f32 %v1270, %v1558
        %v1560 = vpop.f32.mrf.mxu0
        %1561 = vmatprep.mubr.bf16.mxu0 0
        %1562 = vmatmul.mubr.bf16.gmra.mxu0 %v896
        %v1563 = vpop.f32.mrf.mxu0
        %v1564 = vadd.f32 %v1275, %v1563
        %v1565 = vpop.f32.mrf.mxu0
        %v1566 = vpop.f32.mrf.mxu0
        %v1567 = vadd.f32 %v1278, %v1566
        %v1568 = vpop.f32.mrf.mxu0
        %1569 = vmatprep.mubr.bf16.mxu0 0
        %1570 = vmatmul.mubr.bf16.gmra.mxu0 %v899
        %v1571 = vpop.f32.mrf.mxu0
        %v1572 = vadd.f32 %v1283, %v1571
        %v1573 = vpop.f32.mrf.mxu0
        %v1574 = vpop.f32.mrf.mxu0
        %v1575 = vadd.f32 %v1286, %v1574
        %v1576 = vpop.f32.mrf.mxu0
        %1577 = vmatprep.mubr.bf16.mxu0 0
        %1578 = vmatmul.mubr.bf16.gmra.mxu0 %v902
        %v1579 = vpop.f32.mrf.mxu0
        %v1580 = vadd.f32 %v1291, %v1579
        %v1581 = vpop.f32.mrf.mxu0
        %v1582 = vpop.f32.mrf.mxu0
        %v1583 = vadd.f32 %v1294, %v1582
        %v1584 = vpop.f32.mrf.mxu0
        %1585 = vmatprep.mubr.bf16.mxu0 0
        %1586 = vmatmul.mubr.bf16.gmra.mxu0 %v905
        %v1587 = vpop.f32.mrf.mxu0
        %v1588 = vadd.f32 %v1299, %v1587
        %v1589 = vpop.f32.mrf.mxu0
        %v1590 = vpop.f32.mrf.mxu0
        %v1591 = vadd.f32 %v1302, %v1590
        %v1592 = vpop.f32.mrf.mxu0
        %1593 = vmatprep.mubr.bf16.mxu0 0
        %1594 = vmatmul.mubr.bf16.gmra.mxu0 %v908
        %v1595 = vpop.f32.mrf.mxu0
        %v1596 = vadd.f32 %v1307, %v1595
        %v1597 = vpop.f32.mrf.mxu0
        %v1598 = vpop.f32.mrf.mxu0
        %v1599 = vadd.f32 %v1310, %v1598
        %v1600 = vpop.f32.mrf.mxu0
        %1601 = vmatprep.mubr.bf16.mxu0 0
        %1602 = vmatmul.mubr.bf16.gmra.mxu0 %v911
        %v1603 = vpop.f32.mrf.mxu0
        %v1604 = vadd.f32 %v1315, %v1603
        %v1605 = vpop.f32.mrf.mxu0
        %v1606 = vpop.f32.mrf.mxu0
        %v1607 = vadd.f32 %v1318, %v1606
        %v1608 = vpop.f32.mrf.mxu0
        %1609 = vmatprep.mubr.bf16.mxu0 0
        %1610 = vmatmul.mubr.bf16.gmra.mxu0 %v914
        %v1611 = vpop.f32.mrf.mxu0
        %v1612 = vadd.f32 %v1323, %v1611
        %v1613 = vpop.f32.mrf.mxu0
        %v1614 = vpop.f32.mrf.mxu0
        %v1615 = vadd.f32 %v1326, %v1614
        %v1616 = vpop.f32.mrf.mxu0
        %1617 = vmatprep.mubr.bf16.mxu0 0
        %1618 = vmatmul.mubr.bf16.gmra.mxu0 %v917
        %v1619 = vpop.f32.mrf.mxu0
        %v1620 = vadd.f32 %v1331, %v1619
        %v1621 = vpop.f32.mrf.mxu0
        %v1622 = vpop.f32.mrf.mxu0
        %v1623 = vadd.f32 %v1334, %v1622
        %v1624 = vpop.f32.mrf.mxu0
        %1625 = vmatprep.mubr.bf16.mxu0 0
        %1626 = vmatmul.mubr.bf16.gmra.mxu0 %v920
        %v1627 = vpop.f32.mrf.mxu0
        %v1628 = vadd.f32 %v1339, %v1627
        %v1629 = vpop.f32.mrf.mxu0
        %v1630 = vpop.f32.mrf.mxu0
        %v1631 = vadd.f32 %v1342, %v1630
        %v1632 = vpop.f32.mrf.mxu0
        %1633 = vmatprep.mubr.bf16.mxu0 0
        %1634 = vmatmul.mubr.bf16.gmra.mxu0 %v923
        %v1635 = vpop.f32.mrf.mxu0
        %v1636 = vadd.f32 %v1347, %v1635
        %v1637 = vpop.f32.mrf.mxu0
        %v1638 = vpop.f32.mrf.mxu0
        %v1639 = vadd.f32 %v1350, %v1638
        %v1640 = vpop.f32.mrf.mxu0
        %1641 = vmatprep.mubr.bf16.mxu0 0
        %1642 = vmatmul.mubr.bf16.gmra.mxu0 %v926
        %v1643 = vpop.f32.mrf.mxu0
        %v1644 = vadd.f32 %v1355, %v1643
        %v1645 = vpop.f32.mrf.mxu0
        %v1646 = vpop.f32.mrf.mxu0
        %v1647 = vadd.f32 %v1358, %v1646
        %v1648 = vpop.f32.mrf.mxu0
        %1649 = vmatprep.mubr.bf16.mxu0 0
        %1650 = vmatmul.mubr.bf16.gmra.mxu0 %v929
        %v1651 = vpop.f32.mrf.mxu0
        %v1652 = vadd.f32 %v1363, %v1651
        %v1653 = vpop.f32.mrf.mxu0
        %v1654 = vpop.f32.mrf.mxu0
        %v1655 = vadd.f32 %v1366, %v1654
        %v1656 = vpop.f32.mrf.mxu0
        %1657 = vmatprep.mubr.bf16.mxu0 0
        %1658 = vmatmul.mubr.bf16.gmra.mxu0 %v932
        %v1659 = vpop.f32.mrf.mxu0
        %v1660 = vadd.f32 %v1371, %v1659
        %v1661 = vpop.f32.mrf.mxu0
        %v1662 = vpop.f32.mrf.mxu0
        %v1663 = vadd.f32 %v1374, %v1662
        %v1664 = vpop.f32.mrf.mxu0
        %1665 = vmatprep.mubr.bf16.mxu0 0
        %1666 = vmatmul.mubr.bf16.gmra.mxu0 %v935
        %v1667 = vpop.f32.mrf.mxu0
        %v1668 = vadd.f32 %v1379, %v1667
        %v1669 = vpop.f32.mrf.mxu0
        %v1670 = vpop.f32.mrf.mxu0
        %v1671 = vadd.f32 %v1382, %v1670
        %v1672 = vpop.f32.mrf.mxu0
        %1673 = vmatprep.mubr.bf16.mxu0 0
        %1674 = vmatmul.mubr.bf16.gmra.mxu0 %v938
        %v1675 = vpop.f32.mrf.mxu0
        %v1676 = vadd.f32 %v1387, %v1675
        %v1677 = vpop.f32.mrf.mxu0
        %v1678 = vpop.f32.mrf.mxu0
        %v1679 = vadd.f32 %v1390, %v1678
        %v1680 = vpop.f32.mrf.mxu0
        %1681 = vmatprep.mubr.bf16.mxu0 0
        %1682 = vmatmul.mubr.bf16.gmra.mxu0 %v941
        %v1683 = vpop.f32.mrf.mxu0
        %v1684 = vadd.f32 %v1395, %v1683
        %v1685 = vpop.f32.mrf.mxu0
        %v1686 = vpop.f32.mrf.mxu0
        %v1687 = vadd.f32 %v1398, %v1686
        %v1688 = vpop.f32.mrf.mxu0
        %1689 = vmatprep.mubr.bf16.mxu0 0
        %1690 = vmatmul.mubr.bf16.gmra.mxu0 %v944
        %v1691 = vpop.f32.mrf.mxu0
        %v1692 = vadd.f32 %v1403, %v1691
        %v1693 = vpop.f32.mrf.mxu0
        %v1694 = vpop.f32.mrf.mxu0
        %v1695 = vadd.f32 %v1406, %v1694
        %v1696 = vpop.f32.mrf.mxu0
        %1697 = vmatprep.mubr.bf16.mxu0 0
        %1698 = vmatmul.mubr.bf16.gmra.mxu0 %v947
        %v1699 = vpop.f32.mrf.mxu0
        %v1700 = vadd.f32 %v1411, %v1699
        %v1701 = vpop.f32.mrf.mxu0
        %v1702 = vpop.f32.mrf.mxu0
        %v1703 = vadd.f32 %v1414, %v1702
        %v1704 = vpop.f32.mrf.mxu0
        %1705 = vmatprep.mubr.bf16.mxu0 0
        %1706 = vmatmul.mubr.bf16.gmra.mxu0 %v950
        %v1707 = vpop.f32.mrf.mxu0
        %v1708 = vadd.f32 %v1419, %v1707
        %v1709 = vpop.f32.mrf.mxu0
        %v1710 = vpop.f32.mrf.mxu0
        %v1711 = vadd.f32 %v1422, %v1710
        %v1712 = vpop.f32.mrf.mxu0
        %1713 = vmatprep.mubr.bf16.mxu0 0
        %1714 = vmatmul.mubr.bf16.gmra.mxu0 %v953
        %v1715 = vpop.f32.mrf.mxu0
        %v1716 = vadd.f32 %v1427, %v1715
        %v1717 = vpop.f32.mrf.mxu0
        %v1718 = vpop.f32.mrf.mxu0
        %v1719 = vadd.f32 %v1430, %v1718
        %v1720 = vpop.f32.mrf.mxu0
        %1721 = vmatprep.mubr.bf16.mxu0 0
        %1722 = vmatmul.mubr.bf16.gmra.mxu0 %v956
        %v1723 = vpop.f32.mrf.mxu0
        %v1724 = vadd.f32 %v1435, %v1723
        %v1725 = vpop.f32.mrf.mxu0
        %v1726 = vpop.f32.mrf.mxu0
        %v1727 = vadd.f32 %v1438, %v1726
        %v1728 = vpop.f32.mrf.mxu0
        %1729 = vmatprep.mubr.bf16.mxu0 0
        %1730 = vmatmul.mubr.bf16.gmra.mxu0 %v959
        %v1731 = vpop.f32.mrf.mxu0
        %v1732 = vadd.f32 %v1443, %v1731
        %v1733 = vpop.f32.mrf.mxu0
        %v1734 = vpop.f32.mrf.mxu0
        %v1735 = vadd.f32 %v1446, %v1734
        %v1736 = vpop.f32.mrf.mxu0
        %1737 = vmatprep.mubr.bf16.mxu0 0
        %1738 = vmatmul.mubr.bf16.gmra.mxu0 %v962
        %v1739 = vpop.f32.mrf.mxu0
        %v1740 = vadd.f32 %v1451, %v1739
        %v1741 = vpop.f32.mrf.mxu0
        %v1742 = vpop.f32.mrf.mxu0
        %v1743 = vadd.f32 %v1454, %v1742
        %v1744 = vpop.f32.mrf.mxu0
        %1745 = vmatprep.mubr.bf16.mxu0 0
        %1746 = vmatmul.mubr.bf16.gmra.mxu0 %v965
        %v1747 = vpop.f32.mrf.mxu0
        %v1748 = vadd.f32 %v1459, %v1747
        %v1749 = vpop.f32.mrf.mxu0
        %v1750 = vpop.f32.mrf.mxu0
        %v1751 = vadd.f32 %v1462, %v1750
        %v1752 = vpop.f32.mrf.mxu0
        %1753 = vmatprep.mubr.bf16.mxu0 0
        %1754 = vmatmul.mubr.bf16.gmra.mxu0 %v968
        %v1755 = vpop.f32.mrf.mxu0
        %v1756 = vadd.f32 %v1467, %v1755
        %v1757 = vpop.f32.mrf.mxu0
        %v1758 = vpop.f32.mrf.mxu0
        %v1759 = vadd.f32 %v1470, %v1758
        %v1760 = vpop.f32.mrf.mxu0
        %1761 = vmatprep.mubr.bf16.mxu0 0
        %1762 = vmatmul.mubr.bf16.gmra.mxu0 %v971
        %v1763 = vpop.f32.mrf.mxu0
        %v1764 = vadd.f32 %v1475, %v1763
        %v1765 = vpop.f32.mrf.mxu0
        %v1766 = vpop.f32.mrf.mxu0
        %v1767 = vadd.f32 %v1478, %v1766
        %v1768 = vpop.f32.mrf.mxu0
        %1769 = vmatprep.mubr.bf16.mxu0 0
        %1770 = vmatmul.mubr.bf16.gmra.mxu0 %v974
        %v1771 = vpop.f32.mrf.mxu0
        %v1772 = vadd.f32 %v1483, %v1771
        %v1773 = vpop.f32.mrf.mxu0
        %v1774 = vpop.f32.mrf.mxu0
        %v1775 = vadd.f32 %v1486, %v1774
        %v1776 = vpop.f32.mrf.mxu0
        %1777 = vmatprep.mubr.bf16.mxu0 0
        %1778 = vmatmul.mubr.bf16.gmra.mxu0 %v977
        %v1779 = vpop.f32.mrf.mxu0
        %v1780 = vadd.f32 %v1491, %v1779
        %v1781 = vpop.f32.mrf.mxu0
        %v1782 = vpop.f32.mrf.mxu0
        %v1783 = vadd.f32 %v1494, %v1782
        %v1784 = vpop.f32.mrf.mxu0
        %1785 = vmatprep.mubr.bf16.mxu0 0
        %1786 = vmatmul.mubr.bf16.gmra.mxu0 %v980
        %v1787 = vpop.f32.mrf.mxu0
        %v1788 = vadd.f32 %v1499, %v1787
        %v1789 = vpop.f32.mrf.mxu0
        %v1790 = vpop.f32.mrf.mxu0
        %v1791 = vadd.f32 %v1502, %v1790
        %v1792 = vpop.f32.mrf.mxu0
        %1793 = vmatprep.mubr.bf16.mxu0 0
        %1794 = vmatmul.mubr.bf16.gmra.mxu0 %v983
        %v1795 = vpop.f32.mrf.mxu0
        %v1796 = vadd.f32 %v1507, %v1795
        %v1797 = vpop.f32.mrf.mxu0
        %v1798 = vpop.f32.mrf.mxu0
        %v1799 = vadd.f32 %v1510, %v1798
        %v1800 = vpop.f32.mrf.mxu0
        %1801 = vdwg.mxu0
        %v1802 = vadd.f32 %v328, %v1548
        %v1803 = vadd.f32 %v329, %v1551
        %v1804 = vadd.f32 %v330, %v1556
        %v1805 = vadd.f32 %v331, %v1559
        %v1806 = vadd.f32 %v332, %v1564
        %v1807 = vadd.f32 %v333, %v1567
        %v1808 = vadd.f32 %v334, %v1572
        %v1809 = vadd.f32 %v335, %v1575
        %v1810 = vadd.f32 %v336, %v1580
        %v1811 = vadd.f32 %v337, %v1583
        %v1812 = vadd.f32 %v338, %v1588
        %v1813 = vadd.f32 %v339, %v1591
        %v1814 = vadd.f32 %v340, %v1596
        %v1815 = vadd.f32 %v341, %v1599
        %v1816 = vadd.f32 %v342, %v1604
        %v1817 = vadd.f32 %v343, %v1607
        %v1818 = vadd.f32 %v344, %v1612
        %v1819 = vadd.f32 %v345, %v1615
        %v1820 = vadd.f32 %v346, %v1620
        %v1821 = vadd.f32 %v347, %v1623
        %v1822 = vadd.f32 %v348, %v1628
        %v1823 = vadd.f32 %v349, %v1631
        %v1824 = vadd.f32 %v350, %v1636
        %v1825 = vadd.f32 %v351, %v1639
        %v1826 = vadd.f32 %v352, %v1644
        %v1827 = vadd.f32 %v353, %v1647
        %v1828 = vadd.f32 %v354, %v1652
        %v1829 = vadd.f32 %v355, %v1655
        %v1830 = vadd.f32 %v356, %v1660
        %v1831 = vadd.f32 %v357, %v1663
        %v1832 = vadd.f32 %v358, %v1668
        %v1833 = vadd.f32 %v359, %v1671
        %v1834 = vadd.f32 %v360, %v1676
        %v1835 = vadd.f32 %v361, %v1679
        %v1836 = vadd.f32 %v362, %v1684
        %v1837 = vadd.f32 %v363, %v1687
        %v1838 = vadd.f32 %v364, %v1692
        %v1839 = vadd.f32 %v365, %v1695
        %v1840 = vadd.f32 %v366, %v1700
        %v1841 = vadd.f32 %v367, %v1703
        %v1842 = vadd.f32 %v368, %v1708
        %v1843 = vadd.f32 %v369, %v1711
        %v1844 = vadd.f32 %v370, %v1716
        %v1845 = vadd.f32 %v371, %v1719
        %v1846 = vadd.f32 %v372, %v1724
        %v1847 = vadd.f32 %v373, %v1727
        %v1848 = vadd.f32 %v374, %v1732
        %v1849 = vadd.f32 %v375, %v1735
        %v1850 = vadd.f32 %v376, %v1740
        %v1851 = vadd.f32 %v377, %v1743
        %v1852 = vadd.f32 %v378, %v1748
        %v1853 = vadd.f32 %v379, %v1751
        %v1854 = vadd.f32 %v380, %v1756
        %v1855 = vadd.f32 %v381, %v1759
        %v1856 = vadd.f32 %v382, %v1764
        %v1857 = vadd.f32 %v383, %v1767
        %v1858 = vadd.f32 %v384, %v1772
        %v1859 = vadd.f32 %v385, %v1775
        %v1860 = vadd.f32 %v386, %v1780
        %v1861 = vadd.f32 %v387, %v1783
        %v1862 = vadd.f32 %v388, %v1788
        %v1863 = vadd.f32 %v389, %v1791
        %v1864 = vadd.f32 %v390, %v1796
        %v1865 = vadd.f32 %v391, %v1799
        %1866 = vst [vmem:[#allocation2] sm:$0xff] %v1802
        %1867 = vst [vmem:[#allocation2 + $0x8] sm:$0xff] %v1803
        %1868 = vst [vmem:[#allocation2 + $0x10] sm:$0xff] %v1804
        %1869 = vst [vmem:[#allocation2 + $0x18] sm:$0xff] %v1805
        %1870 = vst [vmem:[#allocation2 + $0x20] sm:$0xff] %v1806
        %1871 = vst [vmem:[#allocation2 + $0x28] sm:$0xff] %v1807
        %1872 = vst [vmem:[#allocation2 + $0x30] sm:$0xff] %v1808
        %1873 = vst [vmem:[#allocation2 + $0x38] sm:$0xff] %v1809
        %1874 = vst [vmem:[#allocation2 + $0x40] sm:$0xff] %v1810
        %1875 = vst [vmem:[#allocation2 + $0x48] sm:$0xff] %v1811
        %1876 = vst [vmem:[#allocation2 + $0x50] sm:$0xff] %v1812
        %1877 = vst [vmem:[#allocation2 + $0x58] sm:$0xff] %v1813
        %1878 = vst [vmem:[#allocation2 + $0x60] sm:$0xff] %v1814
        %1879 = vst [vmem:[#allocation2 + $0x68] sm:$0xff] %v1815
        %1880 = vst [vmem:[#allocation2 + $0x70] sm:$0xff] %v1816
        %1881 = vst [vmem:[#allocation2 + $0x78] sm:$0xff] %v1817
        %1882 = vst [vmem:[#allocation2 + $0x80] sm:$0xff] %v1818
        %1883 = vst [vmem:[#allocation2 + $0x88] sm:$0xff] %v1819
        %1884 = vst [vmem:[#allocation2 + $0x90] sm:$0xff] %v1820
        %1885 = vst [vmem:[#allocation2 + $0x98] sm:$0xff] %v1821
        %1886 = vst [vmem:[#allocation2 + $0xa0] sm:$0xff] %v1822
        %1887 = vst [vmem:[#allocation2 + $0xa8] sm:$0xff] %v1823
        %1888 = vst [vmem:[#allocation2 + $0xb0] sm:$0xff] %v1824
        %1889 = vst [vmem:[#allocation2 + $0xb8] sm:$0xff] %v1825
        %1890 = vst [vmem:[#allocation2 + $0xc0] sm:$0xff] %v1826
        %1891 = vst [vmem:[#allocation2 + $0xc8] sm:$0xff] %v1827
        %1892 = vst [vmem:[#allocation2 + $0xd0] sm:$0xff] %v1828
        %1893 = vst [vmem:[#allocation2 + $0xd8] sm:$0xff] %v1829
        %1894 = vst [vmem:[#allocation2 + $0xe0] sm:$0xff] %v1830
        %1895 = vst [vmem:[#allocation2 + $0xe8] sm:$0xff] %v1831
        %1896 = vst [vmem:[#allocation2 + $0xf0] sm:$0xff] %v1832
        %1897 = vst [vmem:[#allocation2 + $0xf8] sm:$0xff] %v1833
        %1898 = vst [vmem:[#allocation2 + $0x100] sm:$0xff] %v1834
        %1899 = vst [vmem:[#allocation2 + $0x108] sm:$0xff] %v1835
        %1900 = vst [vmem:[#allocation2 + $0x110] sm:$0xff] %v1836
        %1901 = vst [vmem:[#allocation2 + $0x118] sm:$0xff] %v1837
        %1902 = vst [vmem:[#allocation2 + $0x120] sm:$0xff] %v1838
        %1903 = vst [vmem:[#allocation2 + $0x128] sm:$0xff] %v1839
        %1904 = vst [vmem:[#allocation2 + $0x130] sm:$0xff] %v1840
        %1905 = vst [vmem:[#allocation2 + $0x138] sm:$0xff] %v1841
        %1906 = vst [vmem:[#allocation2 + $0x140] sm:$0xff] %v1842
        %1907 = vst [vmem:[#allocation2 + $0x148] sm:$0xff] %v1843
        %1908 = vst [vmem:[#allocation2 + $0x150] sm:$0xff] %v1844
        %1909 = vst [vmem:[#allocation2 + $0x158] sm:$0xff] %v1845
        %1910 = vst [vmem:[#allocation2 + $0x160] sm:$0xff] %v1846
        %1911 = vst [vmem:[#allocation2 + $0x168] sm:$0xff] %v1847
        %1912 = vst [vmem:[#allocation2 + $0x170] sm:$0xff] %v1848
        %1913 = vst [vmem:[#allocation2 + $0x178] sm:$0xff] %v1849
        %1914 = vst [vmem:[#allocation2 + $0x180] sm:$0xff] %v1850
        %1915 = vst [vmem:[#allocation2 + $0x188] sm:$0xff] %v1851
        %1916 = vst [vmem:[#allocation2 + $0x190] sm:$0xff] %v1852
        %1917 = vst [vmem:[#allocation2 + $0x198] sm:$0xff] %v1853
        %1918 = vst [vmem:[#allocation2 + $0x1a0] sm:$0xff] %v1854
        %1919 = vst [vmem:[#allocation2 + $0x1a8] sm:$0xff] %v1855
        %1920 = vst [vmem:[#allocation2 + $0x1b0] sm:$0xff] %v1856
        %1921 = vst [vmem:[#allocation2 + $0x1b8] sm:$0xff] %v1857
        %1922 = vst [vmem:[#allocation2 + $0x1c0] sm:$0xff] %v1858
        %1923 = vst [vmem:[#allocation2 + $0x1c8] sm:$0xff] %v1859
        %1924 = vst [vmem:[#allocation2 + $0x1d0] sm:$0xff] %v1860
        %1925 = vst [vmem:[#allocation2 + $0x1d8] sm:$0xff] %v1861
        %1926 = vst [vmem:[#allocation2 + $0x1e0] sm:$0xff] %v1862
        %1927 = vst [vmem:[#allocation2 + $0x1e8] sm:$0xff] %v1863
        %1928 = vst [vmem:[#allocation2 + $0x1f0] sm:$0xff] %v1864
        %1929 = vst [vmem:[#allocation2 + $0x1f8] sm:$0xff] %v1865
        // Predicated region
        $region45: #{tpu_custom_call.1} parent=31 // pred_check
          %p1930 = pneg %p260
        $region46: #{tpu_custom_call.1} parent=31 // pred_check_branch
          %1932 = sbr.rel (%p1930) target = $region48
        $region47: #{tpu_custom_call.1} parent=31 // pred_region
          %v1933 = vld [vmem:[#allocation2] sm:$0xff]
          %v1934 = vld [vmem:[#allocation2 + $0x8] sm:$0xff]
          %v1935 = vld [vmem:[#allocation2 + $0x10] sm:$0xff]
          %v1936 = vld [vmem:[#allocation2 + $0x18] sm:$0xff]
          %v1937 = vld [vmem:[#allocation2 + $0x20] sm:$0xff]
          %v1938 = vld [vmem:[#allocation2 + $0x28] sm:$0xff]
          %v1939 = vld [vmem:[#allocation2 + $0x30] sm:$0xff]
          %v1940 = vld [vmem:[#allocation2 + $0x38] sm:$0xff]
          %v1941 = vld [vmem:[#allocation2 + $0x40] sm:$0xff]
          %v1942 = vld [vmem:[#allocation2 + $0x48] sm:$0xff]
          %v1943 = vld [vmem:[#allocation2 + $0x50] sm:$0xff]
          %v1944 = vld [vmem:[#allocation2 + $0x58] sm:$0xff]
          %v1945 = vld [vmem:[#allocation2 + $0x60] sm:$0xff]
          %v1946 = vld [vmem:[#allocation2 + $0x68] sm:$0xff]
          %v1947 = vld [vmem:[#allocation2 + $0x70] sm:$0xff]
          %v1948 = vld [vmem:[#allocation2 + $0x78] sm:$0xff]
          %v1949 = vld [vmem:[#allocation2 + $0x80] sm:$0xff]
          %v1950 = vld [vmem:[#allocation2 + $0x88] sm:$0xff]
          %v1951 = vld [vmem:[#allocation2 + $0x90] sm:$0xff]
          %v1952 = vld [vmem:[#allocation2 + $0x98] sm:$0xff]
          %v1953 = vld [vmem:[#allocation2 + $0xa0] sm:$0xff]
          %v1954 = vld [vmem:[#allocation2 + $0xa8] sm:$0xff]
          %v1955 = vld [vmem:[#allocation2 + $0xb0] sm:$0xff]
          %v1956 = vld [vmem:[#allocation2 + $0xb8] sm:$0xff]
          %v1957 = vld [vmem:[#allocation2 + $0xc0] sm:$0xff]
          %v1958 = vld [vmem:[#allocation2 + $0xc8] sm:$0xff]
          %v1959 = vld [vmem:[#allocation2 + $0xd0] sm:$0xff]
          %v1960 = vld [vmem:[#allocation2 + $0xd8] sm:$0xff]
          %v1961 = vld [vmem:[#allocation2 + $0xe0] sm:$0xff]
          %v1962 = vld [vmem:[#allocation2 + $0xe8] sm:$0xff]
          %v1963 = vld [vmem:[#allocation2 + $0xf0] sm:$0xff]
          %v1964 = vld [vmem:[#allocation2 + $0xf8] sm:$0xff]
          %v1965 = vld [vmem:[#allocation2 + $0x100] sm:$0xff]
          %v1966 = vld [vmem:[#allocation2 + $0x108] sm:$0xff]
          %v1967 = vld [vmem:[#allocation2 + $0x110] sm:$0xff]
          %v1968 = vld [vmem:[#allocation2 + $0x118] sm:$0xff]
          %v1969 = vld [vmem:[#allocation2 + $0x120] sm:$0xff]
          %v1970 = vld [vmem:[#allocation2 + $0x128] sm:$0xff]
          %v1971 = vld [vmem:[#allocation2 + $0x130] sm:$0xff]
          %v1972 = vld [vmem:[#allocation2 + $0x138] sm:$0xff]
          %v1973 = vld [vmem:[#allocation2 + $0x140] sm:$0xff]
          %v1974 = vld [vmem:[#allocation2 + $0x148] sm:$0xff]
          %v1975 = vld [vmem:[#allocation2 + $0x150] sm:$0xff]
          %v1976 = vld [vmem:[#allocation2 + $0x158] sm:$0xff]
          %v1977 = vld [vmem:[#allocation2 + $0x160] sm:$0xff]
          %v1978 = vld [vmem:[#allocation2 + $0x168] sm:$0xff]
          %v1979 = vld [vmem:[#allocation2 + $0x170] sm:$0xff]
          %v1980 = vld [vmem:[#allocation2 + $0x178] sm:$0xff]
          %v1981 = vld [vmem:[#allocation2 + $0x180] sm:$0xff]
          %v1982 = vld [vmem:[#allocation2 + $0x188] sm:$0xff]
          %v1983 = vld [vmem:[#allocation2 + $0x190] sm:$0xff]
          %v1984 = vld [vmem:[#allocation2 + $0x198] sm:$0xff]
          %v1985 = vld [vmem:[#allocation2 + $0x1a0] sm:$0xff]
          %v1986 = vld [vmem:[#allocation2 + $0x1a8] sm:$0xff]
          %v1987 = vld [vmem:[#allocation2 + $0x1b0] sm:$0xff]
          %v1988 = vld [vmem:[#allocation2 + $0x1b8] sm:$0xff]
          %v1989 = vld [vmem:[#allocation2 + $0x1c0] sm:$0xff]
          %v1990 = vld [vmem:[#allocation2 + $0x1c8] sm:$0xff]
          %v1991 = vld [vmem:[#allocation2 + $0x1d0] sm:$0xff]
          %v1992 = vld [vmem:[#allocation2 + $0x1d8] sm:$0xff]
          %v1993 = vld [vmem:[#allocation2 + $0x1e0] sm:$0xff]
          %v1994 = vld [vmem:[#allocation2 + $0x1e8] sm:$0xff]
          %v1995 = vld [vmem:[#allocation2 + $0x1f0] sm:$0xff]
          %v1996 = vld [vmem:[#allocation2 + $0x1f8] sm:$0xff]
          %v1997 = vld [vmem:[%s257] sm:$0x1]
          %v1999 = vlaneseq
          %v2000 = vshrl.u32 %v1999, 7
          %v2001 = vsub.s32 0, %v2000
          %v2002 = vrot.slane %v1997, %v2001
          %v2004 = vadd.f32 %v1933, %v2002
          %v2005 = vadd.f32 %v1934, %v2002
          %v2006 = vadd.f32 %v1935, %v2002
          %v2007 = vadd.f32 %v1936, %v2002
          %v2008 = vadd.f32 %v1937, %v2002
          %v2009 = vadd.f32 %v1938, %v2002
          %v2010 = vadd.f32 %v1939, %v2002
          %v2011 = vadd.f32 %v1940, %v2002
          %v2012 = vadd.f32 %v1941, %v2002
          %v2013 = vadd.f32 %v1942, %v2002
          %v2014 = vadd.f32 %v1943, %v2002
          %v2015 = vadd.f32 %v1944, %v2002
          %v2016 = vadd.f32 %v1945, %v2002
          %v2017 = vadd.f32 %v1946, %v2002
          %v2018 = vadd.f32 %v1947, %v2002
          %v2019 = vadd.f32 %v1948, %v2002
          %v2020 = vadd.f32 %v1949, %v2002
          %v2021 = vadd.f32 %v1950, %v2002
          %v2022 = vadd.f32 %v1951, %v2002
          %v2023 = vadd.f32 %v1952, %v2002
          %v2024 = vadd.f32 %v1953, %v2002
          %v2025 = vadd.f32 %v1954, %v2002
          %v2026 = vadd.f32 %v1955, %v2002
          %v2027 = vadd.f32 %v1956, %v2002
          %v2028 = vadd.f32 %v1957, %v2002
          %v2029 = vadd.f32 %v1958, %v2002
          %v2030 = vadd.f32 %v1959, %v2002
          %v2031 = vadd.f32 %v1960, %v2002
          %v2032 = vadd.f32 %v1961, %v2002
          %v2033 = vadd.f32 %v1962, %v2002
          %v2034 = vadd.f32 %v1963, %v2002
          %v2035 = vadd.f32 %v1964, %v2002
          %v2036 = vadd.f32 %v1965, %v2002
          %v2037 = vadd.f32 %v1966, %v2002
          %v2038 = vadd.f32 %v1967, %v2002
          %v2039 = vadd.f32 %v1968, %v2002
          %v2040 = vadd.f32 %v1969, %v2002
          %v2041 = vadd.f32 %v1970, %v2002
          %v2042 = vadd.f32 %v1971, %v2002
          %v2043 = vadd.f32 %v1972, %v2002
          %v2044 = vadd.f32 %v1973, %v2002
          %v2045 = vadd.f32 %v1974, %v2002
          %v2046 = vadd.f32 %v1975, %v2002
          %v2047 = vadd.f32 %v1976, %v2002
          %v2048 = vadd.f32 %v1977, %v2002
          %v2049 = vadd.f32 %v1978, %v2002
          %v2050 = vadd.f32 %v1979, %v2002
          %v2051 = vadd.f32 %v1980, %v2002
          %v2052 = vadd.f32 %v1981, %v2002
          %v2053 = vadd.f32 %v1982, %v2002
          %v2054 = vadd.f32 %v1983, %v2002
          %v2055 = vadd.f32 %v1984, %v2002
          %v2056 = vadd.f32 %v1985, %v2002
          %v2057 = vadd.f32 %v1986, %v2002
          %v2058 = vadd.f32 %v1987, %v2002
          %v2059 = vadd.f32 %v1988, %v2002
          %v2060 = vadd.f32 %v1989, %v2002
          %v2061 = vadd.f32 %v1990, %v2002
          %v2062 = vadd.f32 %v1991, %v2002
          %v2063 = vadd.f32 %v1992, %v2002
          %v2064 = vadd.f32 %v1993, %v2002
          %v2065 = vadd.f32 %v1994, %v2002
          %v2066 = vadd.f32 %v1995, %v2002
          %v2067 = vadd.f32 %v1996, %v2002
          %v2068 = vmax.f32 %v2004, 0.0
          %v2069 = vmax.f32 %v2005, 0.0
          %v2070 = vmax.f32 %v2006, 0.0
          %v2071 = vmax.f32 %v2007, 0.0
          %v2072 = vmax.f32 %v2008, 0.0
          %v2073 = vmax.f32 %v2009, 0.0
          %v2074 = vmax.f32 %v2010, 0.0
          %v2075 = vmax.f32 %v2011, 0.0
          %v2076 = vmax.f32 %v2012, 0.0
          %v2077 = vmax.f32 %v2013, 0.0
          %v2078 = vmax.f32 %v2014, 0.0
          %v2079 = vmax.f32 %v2015, 0.0
          %v2080 = vmax.f32 %v2016, 0.0
          %v2081 = vmax.f32 %v2017, 0.0
          %v2082 = vmax.f32 %v2018, 0.0
          %v2083 = vmax.f32 %v2019, 0.0
          %v2084 = vmax.f32 %v2020, 0.0
          %v2085 = vmax.f32 %v2021, 0.0
          %v2086 = vmax.f32 %v2022, 0.0
          %v2087 = vmax.f32 %v2023, 0.0
          %v2088 = vmax.f32 %v2024, 0.0
          %v2089 = vmax.f32 %v2025, 0.0
          %v2090 = vmax.f32 %v2026, 0.0
          %v2091 = vmax.f32 %v2027, 0.0
          %v2092 = vmax.f32 %v2028, 0.0
          %v2093 = vmax.f32 %v2029, 0.0
          %v2094 = vmax.f32 %v2030, 0.0
          %v2095 = vmax.f32 %v2031, 0.0
          %v2096 = vmax.f32 %v2032, 0.0
          %v2097 = vmax.f32 %v2033, 0.0
          %v2098 = vmax.f32 %v2034, 0.0
          %v2099 = vmax.f32 %v2035, 0.0
          %v2100 = vmax.f32 %v2036, 0.0
          %v2101 = vmax.f32 %v2037, 0.0
          %v2102 = vmax.f32 %v2038, 0.0
          %v2103 = vmax.f32 %v2039, 0.0
          %v2104 = vmax.f32 %v2040, 0.0
          %v2105 = vmax.f32 %v2041, 0.0
          %v2106 = vmax.f32 %v2042, 0.0
          %v2107 = vmax.f32 %v2043, 0.0
          %v2108 = vmax.f32 %v2044, 0.0
          %v2109 = vmax.f32 %v2045, 0.0
          %v2110 = vmax.f32 %v2046, 0.0
          %v2111 = vmax.f32 %v2047, 0.0
          %v2112 = vmax.f32 %v2048, 0.0
          %v2113 = vmax.f32 %v2049, 0.0
          %v2114 = vmax.f32 %v2050, 0.0
          %v2115 = vmax.f32 %v2051, 0.0
          %v2116 = vmax.f32 %v2052, 0.0
          %v2117 = vmax.f32 %v2053, 0.0
          %v2118 = vmax.f32 %v2054, 0.0
          %v2119 = vmax.f32 %v2055, 0.0
          %v2120 = vmax.f32 %v2056, 0.0
          %v2121 = vmax.f32 %v2057, 0.0
          %v2122 = vmax.f32 %v2058, 0.0
          %v2123 = vmax.f32 %v2059, 0.0
          %v2124 = vmax.f32 %v2060, 0.0
          %v2125 = vmax.f32 %v2061, 0.0
          %v2126 = vmax.f32 %v2062, 0.0
          %v2127 = vmax.f32 %v2063, 0.0
          %v2128 = vmax.f32 %v2064, 0.0
          %v2129 = vmax.f32 %v2065, 0.0
          %v2130 = vmax.f32 %v2066, 0.0
          %v2131 = vmax.f32 %v2067, 0.0
          %v2132 = vpack.c.bf16 %v2069, %v2068
          %v2133 = vpack.c.bf16 %v2071, %v2070
          %v2134 = vpack.c.bf16 %v2073, %v2072
          %v2135 = vpack.c.bf16 %v2075, %v2074
          %v2136 = vpack.c.bf16 %v2077, %v2076
          %v2137 = vpack.c.bf16 %v2079, %v2078
          %v2138 = vpack.c.bf16 %v2081, %v2080
          %v2139 = vpack.c.bf16 %v2083, %v2082
          %v2140 = vpack.c.bf16 %v2085, %v2084
          %v2141 = vpack.c.bf16 %v2087, %v2086
          %v2142 = vpack.c.bf16 %v2089, %v2088
          %v2143 = vpack.c.bf16 %v2091, %v2090
          %v2144 = vpack.c.bf16 %v2093, %v2092
          %v2145 = vpack.c.bf16 %v2095, %v2094
          %v2146 = vpack.c.bf16 %v2097, %v2096
          %v2147 = vpack.c.bf16 %v2099, %v2098
          %v2148 = vpack.c.bf16 %v2101, %v2100
          %v2149 = vpack.c.bf16 %v2103, %v2102
          %v2150 = vpack.c.bf16 %v2105, %v2104
          %v2151 = vpack.c.bf16 %v2107, %v2106
          %v2152 = vpack.c.bf16 %v2109, %v2108
          %v2153 = vpack.c.bf16 %v2111, %v2110
          %v2154 = vpack.c.bf16 %v2113, %v2112
          %v2155 = vpack.c.bf16 %v2115, %v2114
          %v2156 = vpack.c.bf16 %v2117, %v2116
          %v2157 = vpack.c.bf16 %v2119, %v2118
          %v2158 = vpack.c.bf16 %v2121, %v2120
          %v2159 = vpack.c.bf16 %v2123, %v2122
          %v2160 = vpack.c.bf16 %v2125, %v2124
          %v2161 = vpack.c.bf16 %v2127, %v2126
          %v2162 = vpack.c.bf16 %v2129, %v2128
          %v2163 = vpack.c.bf16 %v2131, %v2130
          %v2196 = vunpack.c.l.b16 %v2132
          %v2197 = vunpack.c.h.b16 %v2132
          %v2198 = vunpack.c.l.b16 %v2133
          %v2199 = vunpack.c.h.b16 %v2133
          %v2200 = vunpack.c.l.b16 %v2134
          %v2201 = vunpack.c.h.b16 %v2134
          %v2202 = vunpack.c.l.b16 %v2135
          %v2203 = vunpack.c.h.b16 %v2135
          %v2204 = vunpack.c.l.b16 %v2136
          %v2205 = vunpack.c.h.b16 %v2136
          %v2206 = vunpack.c.l.b16 %v2137
          %v2207 = vunpack.c.h.b16 %v2137
          %v2208 = vunpack.c.l.b16 %v2138
          %v2209 = vunpack.c.h.b16 %v2138
          %v2210 = vunpack.c.l.b16 %v2139
          %v2211 = vunpack.c.h.b16 %v2139
          %v2212 = vunpack.c.l.b16 %v2140
          %v2213 = vunpack.c.h.b16 %v2140
          %v2214 = vunpack.c.l.b16 %v2141
          %v2215 = vunpack.c.h.b16 %v2141
          %v2216 = vunpack.c.l.b16 %v2142
          %v2217 = vunpack.c.h.b16 %v2142
          %v2218 = vunpack.c.l.b16 %v2143
          %v2219 = vunpack.c.h.b16 %v2143
          %v2220 = vunpack.c.l.b16 %v2144
          %v2221 = vunpack.c.h.b16 %v2144
          %v2222 = vunpack.c.l.b16 %v2145
          %v2223 = vunpack.c.h.b16 %v2145
          %v2224 = vunpack.c.l.b16 %v2146
          %v2225 = vunpack.c.h.b16 %v2146
          %v2226 = vunpack.c.l.b16 %v2147
          %v2227 = vunpack.c.h.b16 %v2147
          %v2228 = vunpack.c.l.b16 %v2148
          %v2229 = vunpack.c.h.b16 %v2148
          %v2230 = vunpack.c.l.b16 %v2149
          %v2231 = vunpack.c.h.b16 %v2149
          %v2232 = vunpack.c.l.b16 %v2150
          %v2233 = vunpack.c.h.b16 %v2150
          %v2234 = vunpack.c.l.b16 %v2151
          %v2235 = vunpack.c.h.b16 %v2151
          %v2236 = vunpack.c.l.b16 %v2152
          %v2237 = vunpack.c.h.b16 %v2152
          %v2238 = vunpack.c.l.b16 %v2153
          %v2239 = vunpack.c.h.b16 %v2153
          %v2240 = vunpack.c.l.b16 %v2154
          %v2241 = vunpack.c.h.b16 %v2154
          %v2242 = vunpack.c.l.b16 %v2155
          %v2243 = vunpack.c.h.b16 %v2155
          %v2244 = vunpack.c.l.b16 %v2156
          %v2245 = vunpack.c.h.b16 %v2156
          %v2246 = vunpack.c.l.b16 %v2157
          %v2247 = vunpack.c.h.b16 %v2157
          %v2248 = vunpack.c.l.b16 %v2158
          %v2249 = vunpack.c.h.b16 %v2158
          %v2250 = vunpack.c.l.b16 %v2159
          %v2251 = vunpack.c.h.b16 %v2159
          %v2252 = vunpack.c.l.b16 %v2160
          %v2253 = vunpack.c.h.b16 %v2160
          %v2254 = vunpack.c.l.b16 %v2161
          %v2255 = vunpack.c.h.b16 %v2161
          %v2256 = vunpack.c.l.b16 %v2162
          %v2257 = vunpack.c.h.b16 %v2162
          %v2258 = vunpack.c.l.b16 %v2163
          %v2259 = vunpack.c.h.b16 %v2163
          %v2260 = vpack.c.b16 %v2196, %v2196
          %v2261 = vpack.c.b16 %v2197, %v2197
          %v2262 = vpack.c.b16 %v2198, %v2198
          %v2263 = vpack.c.b16 %v2199, %v2199
          %v2264 = vpack.c.b16 %v2200, %v2200
          %v2265 = vpack.c.b16 %v2201, %v2201
          %v2266 = vpack.c.b16 %v2202, %v2202
          %v2267 = vpack.c.b16 %v2203, %v2203
          %v2268 = vpack.c.b16 %v2204, %v2204
          %v2269 = vpack.c.b16 %v2205, %v2205
          %v2270 = vpack.c.b16 %v2206, %v2206
          %v2271 = vpack.c.b16 %v2207, %v2207
          %v2272 = vpack.c.b16 %v2208, %v2208
          %v2273 = vpack.c.b16 %v2209, %v2209
          %v2274 = vpack.c.b16 %v2210, %v2210
          %v2275 = vpack.c.b16 %v2211, %v2211
          %v2276 = vpack.c.b16 %v2212, %v2212
          %v2277 = vpack.c.b16 %v2213, %v2213
          %v2278 = vpack.c.b16 %v2214, %v2214
          %v2279 = vpack.c.b16 %v2215, %v2215
          %v2280 = vpack.c.b16 %v2216, %v2216
          %v2281 = vpack.c.b16 %v2217, %v2217
          %v2282 = vpack.c.b16 %v2218, %v2218
          %v2283 = vpack.c.b16 %v2219, %v2219
          %v2284 = vpack.c.b16 %v2220, %v2220
          %v2285 = vpack.c.b16 %v2221, %v2221
          %v2286 = vpack.c.b16 %v2222, %v2222
          %v2287 = vpack.c.b16 %v2223, %v2223
          %v2288 = vpack.c.b16 %v2224, %v2224
          %v2289 = vpack.c.b16 %v2225, %v2225
          %v2290 = vpack.c.b16 %v2226, %v2226
          %v2291 = vpack.c.b16 %v2227, %v2227
          %v2292 = vpack.c.b16 %v2228, %v2228
          %v2293 = vpack.c.b16 %v2229, %v2229
          %v2294 = vpack.c.b16 %v2230, %v2230
          %v2295 = vpack.c.b16 %v2231, %v2231
          %v2296 = vpack.c.b16 %v2232, %v2232
          %v2297 = vpack.c.b16 %v2233, %v2233
          %v2298 = vpack.c.b16 %v2234, %v2234
          %v2299 = vpack.c.b16 %v2235, %v2235
          %v2300 = vpack.c.b16 %v2236, %v2236
          %v2301 = vpack.c.b16 %v2237, %v2237
          %v2302 = vpack.c.b16 %v2238, %v2238
          %v2303 = vpack.c.b16 %v2239, %v2239
          %v2304 = vpack.c.b16 %v2240, %v2240
          %v2305 = vpack.c.b16 %v2241, %v2241
          %v2306 = vpack.c.b16 %v2242, %v2242
          %v2307 = vpack.c.b16 %v2243, %v2243
          %v2308 = vpack.c.b16 %v2244, %v2244
          %v2309 = vpack.c.b16 %v2245, %v2245
          %v2310 = vpack.c.b16 %v2246, %v2246
          %v2311 = vpack.c.b16 %v2247, %v2247
          %v2312 = vpack.c.b16 %v2248, %v2248
          %v2313 = vpack.c.b16 %v2249, %v2249
          %v2314 = vpack.c.b16 %v2250, %v2250
          %v2315 = vpack.c.b16 %v2251, %v2251
          %v2316 = vpack.c.b16 %v2252, %v2252
          %v2317 = vpack.c.b16 %v2253, %v2253
          %v2318 = vpack.c.b16 %v2254, %v2254
          %v2319 = vpack.c.b16 %v2255, %v2255
          %v2320 = vpack.c.b16 %v2256, %v2256
          %v2321 = vpack.c.b16 %v2257, %v2257
          %v2322 = vpack.c.b16 %v2258, %v2258
          %v2323 = vpack.c.b16 %v2259, %v2259
          %2388 = vst [vmem:[%s251] sm:$0xf] %v2260
          %2389 = vst [vmem:[%s251 + $0x4] sm:$0xf] %v2261
          %2390 = vst [vmem:[%s251 + $0x8] sm:$0xf] %v2262
          %2391 = vst [vmem:[%s251 + $0xc] sm:$0xf] %v2263
          %2392 = vst [vmem:[%s251 + $0x10] sm:$0xf] %v2264
          %2393 = vst [vmem:[%s251 + $0x14] sm:$0xf] %v2265
          %2394 = vst [vmem:[%s251 + $0x18] sm:$0xf] %v2266
          %2395 = vst [vmem:[%s251 + $0x1c] sm:$0xf] %v2267
          %2396 = vst [vmem:[%s251 + $0x20] sm:$0xf] %v2268
          %2397 = vst [vmem:[%s251 + $0x24] sm:$0xf] %v2269
          %2398 = vst [vmem:[%s251 + $0x28] sm:$0xf] %v2270
          %2399 = vst [vmem:[%s251 + $0x2c] sm:$0xf] %v2271
          %2400 = vst [vmem:[%s251 + $0x30] sm:$0xf] %v2272
          %2401 = vst [vmem:[%s251 + $0x34] sm:$0xf] %v2273
          %2402 = vst [vmem:[%s251 + $0x38] sm:$0xf] %v2274
          %2403 = vst [vmem:[%s251 + $0x3c] sm:$0xf] %v2275
          %2404 = vst [vmem:[%s251 + $0x40] sm:$0xf] %v2276
          %2405 = vst [vmem:[%s251 + $0x44] sm:$0xf] %v2277
          %2406 = vst [vmem:[%s251 + $0x48] sm:$0xf] %v2278
          %2407 = vst [vmem:[%s251 + $0x4c] sm:$0xf] %v2279
          %2408 = vst [vmem:[%s251 + $0x50] sm:$0xf] %v2280
          %2409 = vst [vmem:[%s251 + $0x54] sm:$0xf] %v2281
          %2410 = vst [vmem:[%s251 + $0x58] sm:$0xf] %v2282
          %2411 = vst [vmem:[%s251 + $0x5c] sm:$0xf] %v2283
          %2412 = vst [vmem:[%s251 + $0x60] sm:$0xf] %v2284
          %2413 = vst [vmem:[%s251 + $0x64] sm:$0xf] %v2285
          %2414 = vst [vmem:[%s251 + $0x68] sm:$0xf] %v2286
          %2415 = vst [vmem:[%s251 + $0x6c] sm:$0xf] %v2287
          %2416 = vst [vmem:[%s251 + $0x70] sm:$0xf] %v2288
          %2417 = vst [vmem:[%s251 + $0x74] sm:$0xf] %v2289
          %2418 = vst [vmem:[%s251 + $0x78] sm:$0xf] %v2290
          %2419 = vst [vmem:[%s251 + $0x7c] sm:$0xf] %v2291
          %2420 = vst [vmem:[%s251 + $0x80] sm:$0xf] %v2292
          %2421 = vst [vmem:[%s251 + $0x84] sm:$0xf] %v2293
          %2422 = vst [vmem:[%s251 + $0x88] sm:$0xf] %v2294
          %2423 = vst [vmem:[%s251 + $0x8c] sm:$0xf] %v2295
          %2424 = vst [vmem:[%s251 + $0x90] sm:$0xf] %v2296
          %2425 = vst [vmem:[%s251 + $0x94] sm:$0xf] %v2297
          %2426 = vst [vmem:[%s251 + $0x98] sm:$0xf] %v2298
          %2427 = vst [vmem:[%s251 + $0x9c] sm:$0xf] %v2299
          %2428 = vst [vmem:[%s251 + $0xa0] sm:$0xf] %v2300
          %2429 = vst [vmem:[%s251 + $0xa4] sm:$0xf] %v2301
          %2430 = vst [vmem:[%s251 + $0xa8] sm:$0xf] %v2302
          %2431 = vst [vmem:[%s251 + $0xac] sm:$0xf] %v2303
          %2432 = vst [vmem:[%s251 + $0xb0] sm:$0xf] %v2304
          %2433 = vst [vmem:[%s251 + $0xb4] sm:$0xf] %v2305
          %2434 = vst [vmem:[%s251 + $0xb8] sm:$0xf] %v2306
          %2435 = vst [vmem:[%s251 + $0xbc] sm:$0xf] %v2307
          %2436 = vst [vmem:[%s251 + $0xc0] sm:$0xf] %v2308
          %2437 = vst [vmem:[%s251 + $0xc4] sm:$0xf] %v2309
          %2438 = vst [vmem:[%s251 + $0xc8] sm:$0xf] %v2310
          %2439 = vst [vmem:[%s251 + $0xcc] sm:$0xf] %v2311
          %2440 = vst [vmem:[%s251 + $0xd0] sm:$0xf] %v2312
          %2441 = vst [vmem:[%s251 + $0xd4] sm:$0xf] %v2313
          %2442 = vst [vmem:[%s251 + $0xd8] sm:$0xf] %v2314
          %2443 = vst [vmem:[%s251 + $0xdc] sm:$0xf] %v2315
          %2444 = vst [vmem:[%s251 + $0xe0] sm:$0xf] %v2316
          %2445 = vst [vmem:[%s251 + $0xe4] sm:$0xf] %v2317
          %2446 = vst [vmem:[%s251 + $0xe8] sm:$0xf] %v2318
          %2447 = vst [vmem:[%s251 + $0xec] sm:$0xf] %v2319
          %2448 = vst [vmem:[%s251 + $0xf0] sm:$0xf] %v2320
          %2449 = vst [vmem:[%s251 + $0xf4] sm:$0xf] %v2321
          %2450 = vst [vmem:[%s251 + $0xf8] sm:$0xf] %v2322
          %2451 = vst [vmem:[%s251 + $0xfc] sm:$0xf] %v2323
        $region48: #{tpu_custom_call.1} parent=31 // pred_fallthru
          _
        %s2452 = sand.u32 %s132, 1
        %s2453 = scalar_lea.sflag [#allocation5], %s2452
        %s2454 = sand.u32 %s132, 1
        %s2455 = smul.addr %s2454, 256
        %s2456 = scalar_lea.vmem [#allocation8], %s2455
        // Predicated region
        $region49: #{tpu_custom_call.1} parent=31 // pred_check
          %p2457 = pneg %p142
        $region50: #{tpu_custom_call.1} parent=31 // pred_check_branch
          %2459 = sbr.rel (%p2457) target = $region52
        $region51: #{tpu_custom_call.1} parent=31 // pred_region
          %s2460 = smul.u32 64, %s26
          %s2462 = ssub.s32 4096, 4096
          %2463 = vsyncadd %s2453, %s2462
          %s2464 = sadd.s32 %s27, %s2460
          %s2465 = smul.addr %s2464, 64
          %s2466 = scalar_lea.hbm %s3, %s2465
          %s2467 = sshll.u32 %s2456, 4
          %s2468 = int_to_ptr.vmem [resolvable:$true] %s2467
          %2473 = dma.vmem_to_hbm [thread:$0]  %s2468, 4096, %s2466, %s2453, 64, 64, 4
        $region52: #{tpu_custom_call.1} parent=31 // pred_fallthru
          _
      $region32: #{tpu_custom_call.1} parent=5 // pred_fallthru
        _
      %p2474 = scmp.le.s32.totalorder 2, %s16
      // Predicated region
      $region53: #{tpu_custom_call.1} parent=5 // pred_check
        %p2475 = pneg %p2474
      $region54: #{tpu_custom_call.1} parent=5 // pred_check_branch
        %2477 = sbr.rel (%p2475) target = $region56
      $region55: #{tpu_custom_call.1} parent=5 // pred_region
        %s2478 = ssub.s32 %s16, 2
        // Predicated region
        $region57: #{tpu_custom_call.1} parent=55 // pred_check
          %p2479 = pneg %p148
        $region58: #{tpu_custom_call.1} parent=55 // pred_check_branch
          %2481 = sbr.rel (%p2479) target = $region60
        $region59: #{tpu_custom_call.1} parent=55 // pred_region
          %s2482 = sand.u32 %s133, 1
          %s2483 = scalar_lea.sflag [#allocation5], %s2482
          %s2484 = sand.u32 %s133, 1
          %s2485 = smul.addr %s2484, 256
          %s2486 = scalar_lea.vmem [#allocation8], %s2485
          %2487 = dma.done %s2483, 4096
        $region60: #{tpu_custom_call.1} parent=55 // pred_fallthru
          _
      $region56: #{tpu_custom_call.1} parent=5 // pred_fallthru
        _
    $region6: #{tpu_custom_call.1} parent=1 // loop_footer
      %s20 = sadd.s32 1, %s16
    $region7: #{tpu_custom_call.1} parent=1 // loop_footer_branch
      %15 = sbr.rel target = $region3
    $region8: #{tpu_custom_call.1} parent=1 // loop_exit
      _
    %2488 = vsyncpa [#allocation4], 1
    %s2489 = scalar_lea.sflag [#allocation4], 1
    %2490 = vsyncpa %s2489, 1
    %2491 = vsyncpa [#allocation7], 1
    %2492 = vsyncpa [#allocation5], 1
    %s2493 = scalar_lea.sflag [#allocation5], 1
    %2494 = vsyncpa %s2493, 1

</llo_original>
